<compile_context>
chip_gen: v7x
topology: tpu7x:2x2x1
jax: 0.10.0
libtpu: 0.0.40
codegen_flags: <defaults>
</compile_context>

<pallas_src>
import numpy as np
import jax
import jax.numpy as jnp
from jax.experimental import pallas as pl
from jax.experimental.pallas import tpu as pltpu


def _ddpm_tables(beta_1, beta_T, T):
    """Host-side schedule buffers, mirroring DDPMSampler.__init__ (float64)."""
    betas = np.linspace(beta_1, beta_T, T, dtype=np.float64)
    alphas = 1.0 - betas
    alphas_bar = np.cumprod(alphas)
    alphas_bar_prev = np.concatenate([[1.0], alphas_bar[:-1]])
    coeff1 = np.sqrt(1.0 / alphas)
    coeff2 = coeff1 * (1.0 - alphas) / np.sqrt(1.0 - alphas_bar)
    posterior_var = betas * (1.0 - alphas_bar_prev) / (1.0 - alphas_bar)
    var = np.concatenate([posterior_var[1:2], betas[1:]])   # __p_mean_variance
    noise_scale = np.sqrt(var)
    noise_scale[0] = 0.0                                    # timestep == 0: noise = 0
    return (coeff1.astype(np.float32),
            coeff2.astype(np.float32),
            noise_scale.astype(np.float32))


def _make_kernel(T):
    inv_T = 1.0 / float(T)
    t_last = T - 1

    def kernel(c1_ref, c2_ref, ns_ref,                       # SMEM (T,) schedule tables
               xT_ref, noise_ref,                            # VMEM activations
               w1t_ref, b1_ref, wt_ref, w2t_ref, b2_ref,     # VMEM weights (tiny)
               out_ref,                                      # VMEM output tile
               x_ref):                                       # VMEM scratch: carried x_t
        k = pl.program_id(1)                                 # grid = (spatial tile, time)
        timestep = t_last - k                                # t = T-1, ..., 0

        @pl.when(k == 0)
        def _init():
            x_ref[...] = xT_ref[...]                         # x_t <- x_T for this tile

        x = x_ref[...]                                       # (B, C, TS)
        Hd = w1t_ref.shape[0]
        C = w1t_ref.shape[1]

        # ---- synthetic eps model: per-pixel MLP over channels + time term ----
        # Channel contractions unrolled as VPU broadcast-FMAs: K is tiny, an MXU
        # pass would be <3% utilized and force operand relayouts.
        t_norm = timestep.astype(jnp.float32) * inv_T
        w1t = w1t_ref[...]                                   # (Hd, C)  == w1.T
        w2t = w2t_ref[...]                                   # (C, Hd)  == w2.T
        bias1 = b1_ref[...] + wt_ref[...] * t_norm           # (Hd, 1)

        h = x[:, 0:1, :] * w1t[None, :, 0:1]
        for c in range(1, C):
            h = h + x[:, c:c + 1, :] * w1t[None, :, c:c + 1]
        h = jnp.maximum(h + bias1[None, :, :], 0.0)          # (B, Hd, TS)

        eps = h[:, 0:1, :] * w2t[None, :, 0:1]
        for j in range(1, Hd):
            eps = eps + h[:, j:j + 1, :] * w2t[None, :, j:j + 1]
        eps = eps + b2_ref[...][None, :, :]                  # (B, C, TS)

        # ---- DDPM reverse update (host-precomputed per-timestep scalars) ----
        c1 = c1_ref[timestep]        # sqrt(1 / alpha_t)
        c2 = c2_ref[timestep]        # coeff1_t * (1 - alpha_t) / sqrt(1 - alphas_bar_t)
        ns = ns_ref[timestep]        # sqrt(var_t); 0 at t == 0 (noise gate folded in)
        x_new = c1 * x - c2 * eps + ns * noise_ref[0]
        x_ref[...] = x_new

        @pl.when(k == t_last)        # only the final x_0 is clipped and stored to HBM
        def _finalize():
            out_ref[...] = jnp.clip(x_new, -1.0, 1.0).astype(out_ref.dtype)

    return kernel


def ddpm_sample(x_T_nchw, noise, params, *, beta_1, beta_T, T, spatial_tile=128):
    """DDPMSampler.sample(x_T) with a synthetic eps model; returns x_0 (NCHW)."""
    B, C, H, W = x_T_nchw.shape
    S = H * W
    x_T = x_T_nchw.reshape(B, C, S).astype(jnp.float32)      # free reshape, lane-dense

    w1, b1, wt, w2, b2 = params
    Hd = w1.shape[1]
    w1t = jnp.asarray(w1, jnp.float32).T                     # (Hd, C)
    w2t = jnp.asarray(w2, jnp.float32).T                     # (C, Hd)
    b1c = jnp.asarray(b1, jnp.float32).reshape(Hd, 1)
    wtc = jnp.asarray(wt, jnp.float32).reshape(Hd, 1)
    b2c = jnp.asarray(b2, jnp.float32).reshape(C, 1)

    c1, c2, ns = (jnp.asarray(t) for t in _ddpm_tables(beta_1, beta_T, T))
    noise = jnp.asarray(noise, jnp.float32)                  # (T, B, C, S) lane-dense

    TS = spatial_tile if (S % spatial_tile == 0) else S
    nst = S // TS

    smem = pl.BlockSpec(memory_space=pltpu.MemorySpace.SMEM)
    grid_spec = pltpu.PrefetchScalarGridSpec(
        num_scalar_prefetch=0,
        grid=(nst, T),
        in_specs=[
            smem, smem, smem,                                          # coeff1/coeff2/sqrt(var)
            pl.BlockSpec((B, C, TS), lambda s, k: (0, 0, s)),          # x_T tile
            pl.BlockSpec((1, B, C, TS), lambda s, k: (k, 0, 0, s)),    # per-step noise slab
            pl.BlockSpec((Hd, C), lambda s, k: (0, 0)),                # w1^T
            pl.BlockSpec((Hd, 1), lambda s, k: (0, 0)),                # b1
            pl.BlockSpec((Hd, 1), lambda s, k: (0, 0)),                # wt (time embed)
            pl.BlockSpec((C, Hd), lambda s, k: (0, 0)),                # w2^T
            pl.BlockSpec((C, 1), lambda s, k: (0, 0)),                 # b2
        ],
        out_specs=pl.BlockSpec((B, C, TS), lambda s, k: (0, 0, s)),
        scratch_shapes=[pltpu.VMEM((B, C, TS), jnp.float32)],          # carried x_t
    )

    out = pl.pallas_call(
        _make_kernel(T),
        grid_spec=grid_spec,
        out_shape=jax.ShapeDtypeStruct((B, C, S), jnp.float32),
        compiler_params=pltpu.CompilerParams(
            dimension_semantics=("parallel", "arbitrary")),
    )(c1, c2, ns, x_T, noise, w1t, b1c, wtc, w2t, b2c)

    return out.reshape(B, C, H, W)


def reference_sample(x_T_nchw, noise, params, *, beta_1, beta_T, T):
    """Pure-JAX reference mirroring DDPMSampler.sample (per-timestep scalar schedule)."""
    B, C, H, W = x_T_nchw.shape
    S = H * W
    coeff1, coeff2, nscale = (jnp.asarray(t) for t in _ddpm_tables(beta_1, beta_T, T))
    w1, b1, wt, w2, b2 = params
    hp = jax.lax.Precision.HIGHEST
    x = x_T_nchw.reshape(B, C, S).astype(jnp.float32)
    for step, t in enumerate(range(T - 1, -1, -1)):
        t_norm = t / T
        h = jnp.einsum('ch,bcs->bhs', w1, x, precision=hp)
        h = jnp.maximum(h + b1[None, :, None] + wt[None, :, None] * t_norm, 0.0)
        eps = jnp.einsum('hc,bhs->bcs', w2, h, precision=hp) + b2[None, :, None]
        x = coeff1[t] * x - coeff2[t] * eps + nscale[t] * noise[step]
    return jnp.clip(x, -1.0, 1.0).reshape(B, C, H, W)


if __name__ == "__main__":
    B, C, H, W = 2, 4, 16, 16
    Hd = 32
    T = 8
    beta_1, beta_T = 1e-4, 0.02
    S = H * W

    key = jax.random.PRNGKey(0)
    k1, k2, k3, k4, k5, k6, k7 = jax.random.split(key, 7)
    x_T = jax.random.normal(k1, (B, C, H, W), jnp.float32)
    noise = jax.random.normal(k2, (T, B, C, S), jnp.float32)   # lane-dense per-step noise

    # deterministic synthetic denoiser parameters (per-pixel MLP over channels)
    w1 = 0.3 * jax.random.normal(k3, (C, Hd), jnp.float32)
    b1 = 0.05 * jax.random.normal(k4, (Hd,), jnp.float32)
    wt = 0.1 * jax.random.normal(k5, (Hd,), jnp.float32)
    w2 = 0.3 * jax.random.normal(k6, (Hd, C), jnp.float32)
    b2 = 0.05 * jax.random.normal(k7, (C,), jnp.float32)
    params = (w1, b1, wt, w2, b2)

    out = ddpm_sample(x_T, noise, params, beta_1=beta_1, beta_T=beta_T, T=T)
    out = jax.block_until_ready(out)

    ref = reference_sample(x_T, noise, params, beta_1=beta_1, beta_T=beta_T, T=T)
    np.testing.assert_allclose(np.asarray(out), np.asarray(ref),
                               rtol=2e-3, atol=2e-3)
    assert not bool(jnp.isnan(out).any()), "nan in tensor."
    assert out.shape == (B, C, H, W)
    print("KERNEL_OK")
</pallas_src>

<mosaic_0001>
module attributes {stable_mosaic.version = 11 : i64} {
  func.func @kernel(%arg0: i32, %arg1: i32, %arg2: memref<8xf32, #tpu.memory_space<smem>>, %arg3: memref<8xf32, #tpu.memory_space<smem>>, %arg4: memref<8xf32, #tpu.memory_space<smem>>, %arg5: memref<2x4x128xf32, #tpu.memory_space<vmem>>, %arg6: memref<1x2x4x128xf32, #tpu.memory_space<vmem>>, %arg7: memref<32x4xf32, #tpu.memory_space<vmem>>, %arg8: memref<32x1xf32, #tpu.memory_space<vmem>>, %arg9: memref<32x1xf32, #tpu.memory_space<vmem>>, %arg10: memref<4x32xf32, #tpu.memory_space<vmem>>, %arg11: memref<4x1xf32, #tpu.memory_space<vmem>>, %arg12: memref<2x4x128xf32, #tpu.memory_space<vmem>>, %arg13: memref<2x4x128xf32, #tpu.memory_space<vmem>>) attributes {dimension_semantics = [#tpu.dimension_semantics<parallel>, #tpu.dimension_semantics<arbitrary>], iteration_bounds = array<i64: 2, 8>, scalar_prefetch = 0 : i64, scratch_operands = 1 : i64, tpu.core_type = #tpu.core_type<tc>, window_params = [{transform_indices = @transform_0, window_bounds = array<i64: 8>}, {transform_indices = @transform_1, window_bounds = array<i64: 8>}, {transform_indices = @transform_2, window_bounds = array<i64: 8>}, {transform_indices = @transform_3, window_bounds = array<i64: 2, 4, 128>}, {transform_indices = @transform_4, window_bounds = array<i64: 1, 2, 4, 128>}, {pipeline_mode = #tpu.pipeline_mode<synchronous>, transform_indices = @transform_5, window_bounds = array<i64: 32, 4>}, {pipeline_mode = #tpu.pipeline_mode<synchronous>, transform_indices = @transform_6, window_bounds = array<i64: 32, 1>}, {pipeline_mode = #tpu.pipeline_mode<synchronous>, transform_indices = @transform_7, window_bounds = array<i64: 32, 1>}, {pipeline_mode = #tpu.pipeline_mode<synchronous>, transform_indices = @transform_8, window_bounds = array<i64: 4, 32>}, {pipeline_mode = #tpu.pipeline_mode<synchronous>, transform_indices = @transform_9, window_bounds = array<i64: 4, 1>}, {transform_indices = @transform_10, window_bounds = array<i64: 2, 4, 128>}]} {
    %c7_i32 = arith.constant 7 : i32
    %0 = arith.subi %c7_i32, %arg1 : i32
    %c0_i32 = arith.constant 0 : i32
    %1 = arith.cmpi eq, %arg1, %c0_i32 : i32
    %2 = arith.extui %1 : i1 to i32
    %c0_i32_0 = arith.constant 0 : i32
    %3 = arith.cmpi ne, %2, %c0_i32_0 : i32
    scf.if %3 {
      %c0_23 = arith.constant 0 : index
      %c0_24 = arith.constant 0 : index
      %c0_25 = arith.constant 0 : index
      %293 = vector.load %arg5[%c0_23, %c0_24, %c0_25] : memref<2x4x128xf32, #tpu.memory_space<vmem>>, vector<2x4x128xf32>
      %c0_26 = arith.constant 0 : index
      %c0_27 = arith.constant 0 : index
      %c0_28 = arith.constant 0 : index
      %294 = vector.load %arg13[%c0_26, %c0_27, %c0_28] : memref<2x4x128xf32, #tpu.memory_space<vmem>>, vector<2x4x128xf32>
      tpu.vector_store %arg13[%c0_26, %c0_27, %c0_28], %293 {strides = array<i32>} : memref<2x4x128xf32, #tpu.memory_space<vmem>>, vector<2x4x128xf32>,
    } else {
    }
    %c0 = arith.constant 0 : index
    %c0_1 = arith.constant 0 : index
    %c0_2 = arith.constant 0 : index
    %4 = vector.load %arg13[%c0, %c0_1, %c0_2] : memref<2x4x128xf32, #tpu.memory_space<vmem>>, vector<2x4x128xf32>
    %5 = arith.sitofp %0 : i32 to f32
    %cst = arith.constant 1.250000e-01 : f32
    %6 = arith.mulf %5, %cst : f32
    %c0_3 = arith.constant 0 : index
    %c0_4 = arith.constant 0 : index
    %7 = vector.load %arg7[%c0_3, %c0_4] : memref<32x4xf32, #tpu.memory_space<vmem>>, vector<32x4xf32>
    %c0_5 = arith.constant 0 : index
    %c0_6 = arith.constant 0 : index
    %8 = vector.load %arg10[%c0_5, %c0_6] : memref<4x32xf32, #tpu.memory_space<vmem>>, vector<4x32xf32>
    %c0_7 = arith.constant 0 : index
    %c0_8 = arith.constant 0 : index
    %9 = vector.load %arg8[%c0_7, %c0_8] : memref<32x1xf32, #tpu.memory_space<vmem>>, vector<32x1xf32>
    %c0_9 = arith.constant 0 : index
    %c0_10 = arith.constant 0 : index
    %10 = vector.load %arg9[%c0_9, %c0_10] : memref<32x1xf32, #tpu.memory_space<vmem>>, vector<32x1xf32>
    %11 = vector.broadcast %6 : f32 to vector<32x1xf32>
    %12 = arith.mulf %10, %11 : vector<32x1xf32>
    %13 = arith.addf %9, %12 : vector<32x1xf32>
    %14 = vector.extract_strided_slice %4 {offsets = [0, 0, 0], sizes = [2, 1, 128], strides = [1, 1, 1]} : vector<2x4x128xf32> to vector<2x1x128xf32>
    %15 = vector.extract_strided_slice %7 {offsets = [0, 0], sizes = [32, 1], strides = [1, 1]} : vector<32x4xf32> to vector<32x1xf32>
    %16 = vector.shape_cast %15 : vector<32x1xf32> to vector<1x32x1xf32>
    %17 = vector.broadcast %14 : vector<2x1x128xf32> to vector<2x32x128xf32>
    %18 = vector.broadcast %16 : vector<1x32x1xf32> to vector<2x32x128xf32>
    %19 = arith.mulf %17, %18 : vector<2x32x128xf32>
    %20 = vector.extract_strided_slice %4 {offsets = [0, 1, 0], sizes = [2, 1, 128], strides = [1, 1, 1]} : vector<2x4x128xf32> to vector<2x1x128xf32>
    %21 = vector.extract_strided_slice %7 {offsets = [0, 1], sizes = [32, 1], strides = [1, 1]} : vector<32x4xf32> to vector<32x1xf32>
    %22 = vector.shape_cast %21 : vector<32x1xf32> to vector<1x32x1xf32>
    %23 = vector.broadcast %20 : vector<2x1x128xf32> to vector<2x32x128xf32>
    %24 = vector.broadcast %22 : vector<1x32x1xf32> to vector<2x32x128xf32>
    %25 = arith.mulf %23, %24 : vector<2x32x128xf32>
    %26 = arith.addf %19, %25 : vector<2x32x128xf32>
    %27 = vector.extract_strided_slice %4 {offsets = [0, 2, 0], sizes = [2, 1, 128], strides = [1, 1, 1]} : vector<2x4x128xf32> to vector<2x1x128xf32>
    %28 = vector.extract_strided_slice %7 {offsets = [0, 2], sizes = [32, 1], strides = [1, 1]} : vector<32x4xf32> to vector<32x1xf32>
    %29 = vector.shape_cast %28 : vector<32x1xf32> to vector<1x32x1xf32>
    %30 = vector.broadcast %27 : vector<2x1x128xf32> to vector<2x32x128xf32>
    %31 = vector.broadcast %29 : vector<1x32x1xf32> to vector<2x32x128xf32>
    %32 = arith.mulf %30, %31 : vector<2x32x128xf32>
    %33 = arith.addf %26, %32 : vector<2x32x128xf32>
    %34 = vector.extract_strided_slice %4 {offsets = [0, 3, 0], sizes = [2, 1, 128], strides = [1, 1, 1]} : vector<2x4x128xf32> to vector<2x1x128xf32>
    %35 = vector.extract_strided_slice %7 {offsets = [0, 3], sizes = [32, 1], strides = [1, 1]} : vector<32x4xf32> to vector<32x1xf32>
    %36 = vector.shape_cast %35 : vector<32x1xf32> to vector<1x32x1xf32>
    %37 = vector.broadcast %34 : vector<2x1x128xf32> to vector<2x32x128xf32>
    %38 = vector.broadcast %36 : vector<1x32x1xf32> to vector<2x32x128xf32>
    %39 = arith.mulf %37, %38 : vector<2x32x128xf32>
    %40 = arith.addf %33, %39 : vector<2x32x128xf32>
    %41 = vector.shape_cast %13 : vector<32x1xf32> to vector<1x32x1xf32>
    %42 = vector.broadcast %41 : vector<1x32x1xf32> to vector<2x32x128xf32>
    %43 = arith.addf %40, %42 : vector<2x32x128xf32>
    %cst_11 = arith.constant 0.000000e+00 : f32
    %44 = vector.broadcast %cst_11 : f32 to vector<2x32x128xf32>
    %45 = arith.maximumf %43, %44 : vector<2x32x128xf32>
    %46 = vector.extract_strided_slice %45 {offsets = [0, 0, 0], sizes = [2, 1, 128], strides = [1, 1, 1]} : vector<2x32x128xf32> to vector<2x1x128xf32>
    %47 = vector.extract_strided_slice %8 {offsets = [0, 0], sizes = [4, 1], strides = [1, 1]} : vector<4x32xf32> to vector<4x1xf32>
    %48 = vector.shape_cast %47 : vector<4x1xf32> to vector<1x4x1xf32>
    %49 = vector.broadcast %46 : vector<2x1x128xf32> to vector<2x4x128xf32>
    %50 = vector.broadcast %48 : vector<1x4x1xf32> to vector<2x4x128xf32>
    %51 = arith.mulf %49, %50 : vector<2x4x128xf32>
    %52 = vector.extract_strided_slice %45 {offsets = [0, 1, 0], sizes = [2, 1, 128], strides = [1, 1, 1]} : vector<2x32x128xf32> to vector<2x1x128xf32>
    %53 = vector.extract_strided_slice %8 {offsets = [0, 1], sizes = [4, 1], strides = [1, 1]} : vector<4x32xf32> to vector<4x1xf32>
    %54 = vector.shape_cast %53 : vector<4x1xf32> to vector<1x4x1xf32>
    %55 = vector.broadcast %52 : vector<2x1x128xf32> to vector<2x4x128xf32>
    %56 = vector.broadcast %54 : vector<1x4x1xf32> to vector<2x4x128xf32>
    %57 = arith.mulf %55, %56 : vector<2x4x128xf32>
    %58 = arith.addf %51, %57 : vector<2x4x128xf32>
    %59 = vector.extract_strided_slice %45 {offsets = [0, 2, 0], sizes = [2, 1, 128], strides = [1, 1, 1]} : vector<2x32x128xf32> to vector<2x1x128xf32>
    %60 = vector.extract_strided_slice %8 {offsets = [0, 2], sizes = [4, 1], strides = [1, 1]} : vector<4x32xf32> to vector<4x1xf32>
    %61 = vector.shape_cast %60 : vector<4x1xf32> to vector<1x4x1xf32>
    %62 = vector.broadcast %59 : vector<2x1x128xf32> to vector<2x4x128xf32>
    %63 = vector.broadcast %61 : vector<1x4x1xf32> to vector<2x4x128xf32>
    %64 = arith.mulf %62, %63 : vector<2x4x128xf32>
    %65 = arith.addf %58, %64 : vector<2x4x128xf32>
    %66 = vector.extract_strided_slice %45 {offsets = [0, 3, 0], sizes = [2, 1, 128], strides = [1, 1, 1]} : vector<2x32x128xf32> to vector<2x1x128xf32>
    %67 = vector.extract_strided_slice %8 {offsets = [0, 3], sizes = [4, 1], strides = [1, 1]} : vector<4x32xf32> to vector<4x1xf32>
    %68 = vector.shape_cast %67 : vector<4x1xf32> to vector<1x4x1xf32>
    %69 = vector.broadcast %66 : vector<2x1x128xf32> to vector<2x4x128xf32>
    %70 = vector.broadcast %68 : vector<1x4x1xf32> to vector<2x4x128xf32>
    %71 = arith.mulf %69, %70 : vector<2x4x128xf32>
    %72 = arith.addf %65, %71 : vector<2x4x128xf32>
    %73 = vector.extract_strided_slice %45 {offsets = [0, 4, 0], sizes = [2, 1, 128], strides = [1, 1, 1]} : vector<2x32x128xf32> to vector<2x1x128xf32>
    %74 = vector.extract_strided_slice %8 {offsets = [0, 4], sizes = [4, 1], strides = [1, 1]} : vector<4x32xf32> to vector<4x1xf32>
    %75 = vector.shape_cast %74 : vector<4x1xf32> to vector<1x4x1xf32>
    %76 = vector.broadcast %73 : vector<2x1x128xf32> to vector<2x4x128xf32>
    %77 = vector.broadcast %75 : vector<1x4x1xf32> to vector<2x4x128xf32>
    %78 = arith.mulf %76, %77 : vector<2x4x128xf32>
    %79 = arith.addf %72, %78 : vector<2x4x128xf32>
    %80 = vector.extract_strided_slice %45 {offsets = [0, 5, 0], sizes = [2, 1, 128], strides = [1, 1, 1]} : vector<2x32x128xf32> to vector<2x1x128xf32>
    %81 = vector.extract_strided_slice %8 {offsets = [0, 5], sizes = [4, 1], strides = [1, 1]} : vector<4x32xf32> to vector<4x1xf32>
    %82 = vector.shape_cast %81 : vector<4x1xf32> to vector<1x4x1xf32>
    %83 = vector.broadcast %80 : vector<2x1x128xf32> to vector<2x4x128xf32>
    %84 = vector.broadcast %82 : vector<1x4x1xf32> to vector<2x4x128xf32>
    %85 = arith.mulf %83, %84 : vector<2x4x128xf32>
    %86 = arith.addf %79, %85 : vector<2x4x128xf32>
    %87 = vector.extract_strided_slice %45 {offsets = [0, 6, 0], sizes = [2, 1, 128], strides = [1, 1, 1]} : vector<2x32x128xf32> to vector<2x1x128xf32>
    %88 = vector.extract_strided_slice %8 {offsets = [0, 6], sizes = [4, 1], strides = [1, 1]} : vector<4x32xf32> to vector<4x1xf32>
    %89 = vector.shape_cast %88 : vector<4x1xf32> to vector<1x4x1xf32>
    %90 = vector.broadcast %87 : vector<2x1x128xf32> to vector<2x4x128xf32>
    %91 = vector.broadcast %89 : vector<1x4x1xf32> to vector<2x4x128xf32>
    %92 = arith.mulf %90, %91 : vector<2x4x128xf32>
    %93 = arith.addf %86, %92 : vector<2x4x128xf32>
    %94 = vector.extract_strided_slice %45 {offsets = [0, 7, 0], sizes = [2, 1, 128], strides = [1, 1, 1]} : vector<2x32x128xf32> to vector<2x1x128xf32>
    %95 = vector.extract_strided_slice %8 {offsets = [0, 7], sizes = [4, 1], strides = [1, 1]} : vector<4x32xf32> to vector<4x1xf32>
    %96 = vector.shape_cast %95 : vector<4x1xf32> to vector<1x4x1xf32>
    %97 = vector.broadcast %94 : vector<2x1x128xf32> to vector<2x4x128xf32>
    %98 = vector.broadcast %96 : vector<1x4x1xf32> to vector<2x4x128xf32>
    %99 = arith.mulf %97, %98 : vector<2x4x128xf32>
    %100 = arith.addf %93, %99 : vector<2x4x128xf32>
    %101 = vector.extract_strided_slice %45 {offsets = [0, 8, 0], sizes = [2, 1, 128], strides = [1, 1, 1]} : vector<2x32x128xf32> to vector<2x1x128xf32>
    %102 = vector.extract_strided_slice %8 {offsets = [0, 8], sizes = [4, 1], strides = [1, 1]} : vector<4x32xf32> to vector<4x1xf32>
    %103 = vector.shape_cast %102 : vector<4x1xf32> to vector<1x4x1xf32>
    %104 = vector.broadcast %101 : vector<2x1x128xf32> to vector<2x4x128xf32>
    %105 = vector.broadcast %103 : vector<1x4x1xf32> to vector<2x4x128xf32>
    %106 = arith.mulf %104, %105 : vector<2x4x128xf32>
    %107 = arith.addf %100, %106 : vector<2x4x128xf32>
    %108 = vector.extract_strided_slice %45 {offsets = [0, 9, 0], sizes = [2, 1, 128], strides = [1, 1, 1]} : vector<2x32x128xf32> to vector<2x1x128xf32>
    %109 = vector.extract_strided_slice %8 {offsets = [0, 9], sizes = [4, 1], strides = [1, 1]} : vector<4x32xf32> to vector<4x1xf32>
    %110 = vector.shape_cast %109 : vector<4x1xf32> to vector<1x4x1xf32>
    %111 = vector.broadcast %108 : vector<2x1x128xf32> to vector<2x4x128xf32>
    %112 = vector.broadcast %110 : vector<1x4x1xf32> to vector<2x4x128xf32>
    %113 = arith.mulf %111, %112 : vector<2x4x128xf32>
    %114 = arith.addf %107, %113 : vector<2x4x128xf32>
    %115 = vector.extract_strided_slice %45 {offsets = [0, 10, 0], sizes = [2, 1, 128], strides = [1, 1, 1]} : vector<2x32x128xf32> to vector<2x1x128xf32>
    %116 = vector.extract_strided_slice %8 {offsets = [0, 10], sizes = [4, 1], strides = [1, 1]} : vector<4x32xf32> to vector<4x1xf32>
    %117 = vector.shape_cast %116 : vector<4x1xf32> to vector<1x4x1xf32>
    %118 = vector.broadcast %115 : vector<2x1x128xf32> to vector<2x4x128xf32>
    %119 = vector.broadcast %117 : vector<1x4x1xf32> to vector<2x4x128xf32>
    %120 = arith.mulf %118, %119 : vector<2x4x128xf32>
    %121 = arith.addf %114, %120 : vector<2x4x128xf32>
    %122 = vector.extract_strided_slice %45 {offsets = [0, 11, 0], sizes = [2, 1, 128], strides = [1, 1, 1]} : vector<2x32x128xf32> to vector<2x1x128xf32>
    %123 = vector.extract_strided_slice %8 {offsets = [0, 11], sizes = [4, 1], strides = [1, 1]} : vector<4x32xf32> to vector<4x1xf32>
    %124 = vector.shape_cast %123 : vector<4x1xf32> to vector<1x4x1xf32>
    %125 = vector.broadcast %122 : vector<2x1x128xf32> to vector<2x4x128xf32>
    %126 = vector.broadcast %124 : vector<1x4x1xf32> to vector<2x4x128xf32>
    %127 = arith.mulf %125, %126 : vector<2x4x128xf32>
    %128 = arith.addf %121, %127 : vector<2x4x128xf32>
    %129 = vector.extract_strided_slice %45 {offsets = [0, 12, 0], sizes = [2, 1, 128], strides = [1, 1, 1]} : vector<2x32x128xf32> to vector<2x1x128xf32>
    %130 = vector.extract_strided_slice %8 {offsets = [0, 12], sizes = [4, 1], strides = [1, 1]} : vector<4x32xf32> to vector<4x1xf32>
    %131 = vector.shape_cast %130 : vector<4x1xf32> to vector<1x4x1xf32>
    %132 = vector.broadcast %129 : vector<2x1x128xf32> to vector<2x4x128xf32>
    %133 = vector.broadcast %131 : vector<1x4x1xf32> to vector<2x4x128xf32>
    %134 = arith.mulf %132, %133 : vector<2x4x128xf32>
    %135 = arith.addf %128, %134 : vector<2x4x128xf32>
    %136 = vector.extract_strided_slice %45 {offsets = [0, 13, 0], sizes = [2, 1, 128], strides = [1, 1, 1]} : vector<2x32x128xf32> to vector<2x1x128xf32>
    %137 = vector.extract_strided_slice %8 {offsets = [0, 13], sizes = [4, 1], strides = [1, 1]} : vector<4x32xf32> to vector<4x1xf32>
    %138 = vector.shape_cast %137 : vector<4x1xf32> to vector<1x4x1xf32>
    %139 = vector.broadcast %136 : vector<2x1x128xf32> to vector<2x4x128xf32>
    %140 = vector.broadcast %138 : vector<1x4x1xf32> to vector<2x4x128xf32>
    %141 = arith.mulf %139, %140 : vector<2x4x128xf32>
    %142 = arith.addf %135, %141 : vector<2x4x128xf32>
    %143 = vector.extract_strided_slice %45 {offsets = [0, 14, 0], sizes = [2, 1, 128], strides = [1, 1, 1]} : vector<2x32x128xf32> to vector<2x1x128xf32>
    %144 = vector.extract_strided_slice %8 {offsets = [0, 14], sizes = [4, 1], strides = [1, 1]} : vector<4x32xf32> to vector<4x1xf32>
    %145 = vector.shape_cast %144 : vector<4x1xf32> to vector<1x4x1xf32>
    %146 = vector.broadcast %143 : vector<2x1x128xf32> to vector<2x4x128xf32>
    %147 = vector.broadcast %145 : vector<1x4x1xf32> to vector<2x4x128xf32>
    %148 = arith.mulf %146, %147 : vector<2x4x128xf32>
    %149 = arith.addf %142, %148 : vector<2x4x128xf32>
    %150 = vector.extract_strided_slice %45 {offsets = [0, 15, 0], sizes = [2, 1, 128], strides = [1, 1, 1]} : vector<2x32x128xf32> to vector<2x1x128xf32>
    %151 = vector.extract_strided_slice %8 {offsets = [0, 15], sizes = [4, 1], strides = [1, 1]} : vector<4x32xf32> to vector<4x1xf32>
    %152 = vector.shape_cast %151 : vector<4x1xf32> to vector<1x4x1xf32>
    %153 = vector.broadcast %150 : vector<2x1x128xf32> to vector<2x4x128xf32>
    %154 = vector.broadcast %152 : vector<1x4x1xf32> to vector<2x4x128xf32>
    %155 = arith.mulf %153, %154 : vector<2x4x128xf32>
    %156 = arith.addf %149, %155 : vector<2x4x128xf32>
    %157 = vector.extract_strided_slice %45 {offsets = [0, 16, 0], sizes = [2, 1, 128], strides = [1, 1, 1]} : vector<2x32x128xf32> to vector<2x1x128xf32>
    %158 = vector.extract_strided_slice %8 {offsets = [0, 16], sizes = [4, 1], strides = [1, 1]} : vector<4x32xf32> to vector<4x1xf32>
    %159 = vector.shape_cast %158 : vector<4x1xf32> to vector<1x4x1xf32>
    %160 = vector.broadcast %157 : vector<2x1x128xf32> to vector<2x4x128xf32>
    %161 = vector.broadcast %159 : vector<1x4x1xf32> to vector<2x4x128xf32>
    %162 = arith.mulf %160, %161 : vector<2x4x128xf32>
    %163 = arith.addf %156, %162 : vector<2x4x128xf32>
    %164 = vector.extract_strided_slice %45 {offsets = [0, 17, 0], sizes = [2, 1, 128], strides = [1, 1, 1]} : vector<2x32x128xf32> to vector<2x1x128xf32>
    %165 = vector.extract_strided_slice %8 {offsets = [0, 17], sizes = [4, 1], strides = [1, 1]} : vector<4x32xf32> to vector<4x1xf32>
    %166 = vector.shape_cast %165 : vector<4x1xf32> to vector<1x4x1xf32>
    %167 = vector.broadcast %164 : vector<2x1x128xf32> to vector<2x4x128xf32>
    %168 = vector.broadcast %166 : vector<1x4x1xf32> to vector<2x4x128xf32>
    %169 = arith.mulf %167, %168 : vector<2x4x128xf32>
    %170 = arith.addf %163, %169 : vector<2x4x128xf32>
    %171 = vector.extract_strided_slice %45 {offsets = [0, 18, 0], sizes = [2, 1, 128], strides = [1, 1, 1]} : vector<2x32x128xf32> to vector<2x1x128xf32>
    %172 = vector.extract_strided_slice %8 {offsets = [0, 18], sizes = [4, 1], strides = [1, 1]} : vector<4x32xf32> to vector<4x1xf32>
    %173 = vector.shape_cast %172 : vector<4x1xf32> to vector<1x4x1xf32>
    %174 = vector.broadcast %171 : vector<2x1x128xf32> to vector<2x4x128xf32>
    %175 = vector.broadcast %173 : vector<1x4x1xf32> to vector<2x4x128xf32>
    %176 = arith.mulf %174, %175 : vector<2x4x128xf32>
    %177 = arith.addf %170, %176 : vector<2x4x128xf32>
    %178 = vector.extract_strided_slice %45 {offsets = [0, 19, 0], sizes = [2, 1, 128], strides = [1, 1, 1]} : vector<2x32x128xf32> to vector<2x1x128xf32>
    %179 = vector.extract_strided_slice %8 {offsets = [0, 19], sizes = [4, 1], strides = [1, 1]} : vector<4x32xf32> to vector<4x1xf32>
    %180 = vector.shape_cast %179 : vector<4x1xf32> to vector<1x4x1xf32>
    %181 = vector.broadcast %178 : vector<2x1x128xf32> to vector<2x4x128xf32>
    %182 = vector.broadcast %180 : vector<1x4x1xf32> to vector<2x4x128xf32>
    %183 = arith.mulf %181, %182 : vector<2x4x128xf32>
    %184 = arith.addf %177, %183 : vector<2x4x128xf32>
    %185 = vector.extract_strided_slice %45 {offsets = [0, 20, 0], sizes = [2, 1, 128], strides = [1, 1, 1]} : vector<2x32x128xf32> to vector<2x1x128xf32>
    %186 = vector.extract_strided_slice %8 {offsets = [0, 20], sizes = [4, 1], strides = [1, 1]} : vector<4x32xf32> to vector<4x1xf32>
    %187 = vector.shape_cast %186 : vector<4x1xf32> to vector<1x4x1xf32>
    %188 = vector.broadcast %185 : vector<2x1x128xf32> to vector<2x4x128xf32>
    %189 = vector.broadcast %187 : vector<1x4x1xf32> to vector<2x4x128xf32>
    %190 = arith.mulf %188, %189 : vector<2x4x128xf32>
    %191 = arith.addf %184, %190 : vector<2x4x128xf32>
    %192 = vector.extract_strided_slice %45 {offsets = [0, 21, 0], sizes = [2, 1, 128], strides = [1, 1, 1]} : vector<2x32x128xf32> to vector<2x1x128xf32>
    %193 = vector.extract_strided_slice %8 {offsets = [0, 21], sizes = [4, 1], strides = [1, 1]} : vector<4x32xf32> to vector<4x1xf32>
    %194 = vector.shape_cast %193 : vector<4x1xf32> to vector<1x4x1xf32>
    %195 = vector.broadcast %192 : vector<2x1x128xf32> to vector<2x4x128xf32>
    %196 = vector.broadcast %194 : vector<1x4x1xf32> to vector<2x4x128xf32>
    %197 = arith.mulf %195, %196 : vector<2x4x128xf32>
    %198 = arith.addf %191, %197 : vector<2x4x128xf32>
    %199 = vector.extract_strided_slice %45 {offsets = [0, 22, 0], sizes = [2, 1, 128], strides = [1, 1, 1]} : vector<2x32x128xf32> to vector<2x1x128xf32>
    %200 = vector.extract_strided_slice %8 {offsets = [0, 22], sizes = [4, 1], strides = [1, 1]} : vector<4x32xf32> to vector<4x1xf32>
    %201 = vector.shape_cast %200 : vector<4x1xf32> to vector<1x4x1xf32>
    %202 = vector.broadcast %199 : vector<2x1x128xf32> to vector<2x4x128xf32>
    %203 = vector.broadcast %201 : vector<1x4x1xf32> to vector<2x4x128xf32>
    %204 = arith.mulf %202, %203 : vector<2x4x128xf32>
    %205 = arith.addf %198, %204 : vector<2x4x128xf32>
    %206 = vector.extract_strided_slice %45 {offsets = [0, 23, 0], sizes = [2, 1, 128], strides = [1, 1, 1]} : vector<2x32x128xf32> to vector<2x1x128xf32>
    %207 = vector.extract_strided_slice %8 {offsets = [0, 23], sizes = [4, 1], strides = [1, 1]} : vector<4x32xf32> to vector<4x1xf32>
    %208 = vector.shape_cast %207 : vector<4x1xf32> to vector<1x4x1xf32>
    %209 = vector.broadcast %206 : vector<2x1x128xf32> to vector<2x4x128xf32>
    %210 = vector.broadcast %208 : vector<1x4x1xf32> to vector<2x4x128xf32>
    %211 = arith.mulf %209, %210 : vector<2x4x128xf32>
    %212 = arith.addf %205, %211 : vector<2x4x128xf32>
    %213 = vector.extract_strided_slice %45 {offsets = [0, 24, 0], sizes = [2, 1, 128], strides = [1, 1, 1]} : vector<2x32x128xf32> to vector<2x1x128xf32>
    %214 = vector.extract_strided_slice %8 {offsets = [0, 24], sizes = [4, 1], strides = [1, 1]} : vector<4x32xf32> to vector<4x1xf32>
    %215 = vector.shape_cast %214 : vector<4x1xf32> to vector<1x4x1xf32>
    %216 = vector.broadcast %213 : vector<2x1x128xf32> to vector<2x4x128xf32>
    %217 = vector.broadcast %215 : vector<1x4x1xf32> to vector<2x4x128xf32>
    %218 = arith.mulf %216, %217 : vector<2x4x128xf32>
    %219 = arith.addf %212, %218 : vector<2x4x128xf32>
    %220 = vector.extract_strided_slice %45 {offsets = [0, 25, 0], sizes = [2, 1, 128], strides = [1, 1, 1]} : vector<2x32x128xf32> to vector<2x1x128xf32>
    %221 = vector.extract_strided_slice %8 {offsets = [0, 25], sizes = [4, 1], strides = [1, 1]} : vector<4x32xf32> to vector<4x1xf32>
    %222 = vector.shape_cast %221 : vector<4x1xf32> to vector<1x4x1xf32>
    %223 = vector.broadcast %220 : vector<2x1x128xf32> to vector<2x4x128xf32>
    %224 = vector.broadcast %222 : vector<1x4x1xf32> to vector<2x4x128xf32>
    %225 = arith.mulf %223, %224 : vector<2x4x128xf32>
    %226 = arith.addf %219, %225 : vector<2x4x128xf32>
    %227 = vector.extract_strided_slice %45 {offsets = [0, 26, 0], sizes = [2, 1, 128], strides = [1, 1, 1]} : vector<2x32x128xf32> to vector<2x1x128xf32>
    %228 = vector.extract_strided_slice %8 {offsets = [0, 26], sizes = [4, 1], strides = [1, 1]} : vector<4x32xf32> to vector<4x1xf32>
    %229 = vector.shape_cast %228 : vector<4x1xf32> to vector<1x4x1xf32>
    %230 = vector.broadcast %227 : vector<2x1x128xf32> to vector<2x4x128xf32>
    %231 = vector.broadcast %229 : vector<1x4x1xf32> to vector<2x4x128xf32>
    %232 = arith.mulf %230, %231 : vector<2x4x128xf32>
    %233 = arith.addf %226, %232 : vector<2x4x128xf32>
    %234 = vector.extract_strided_slice %45 {offsets = [0, 27, 0], sizes = [2, 1, 128], strides = [1, 1, 1]} : vector<2x32x128xf32> to vector<2x1x128xf32>
    %235 = vector.extract_strided_slice %8 {offsets = [0, 27], sizes = [4, 1], strides = [1, 1]} : vector<4x32xf32> to vector<4x1xf32>
    %236 = vector.shape_cast %235 : vector<4x1xf32> to vector<1x4x1xf32>
    %237 = vector.broadcast %234 : vector<2x1x128xf32> to vector<2x4x128xf32>
    %238 = vector.broadcast %236 : vector<1x4x1xf32> to vector<2x4x128xf32>
    %239 = arith.mulf %237, %238 : vector<2x4x128xf32>
    %240 = arith.addf %233, %239 : vector<2x4x128xf32>
    %241 = vector.extract_strided_slice %45 {offsets = [0, 28, 0], sizes = [2, 1, 128], strides = [1, 1, 1]} : vector<2x32x128xf32> to vector<2x1x128xf32>
    %242 = vector.extract_strided_slice %8 {offsets = [0, 28], sizes = [4, 1], strides = [1, 1]} : vector<4x32xf32> to vector<4x1xf32>
    %243 = vector.shape_cast %242 : vector<4x1xf32> to vector<1x4x1xf32>
    %244 = vector.broadcast %241 : vector<2x1x128xf32> to vector<2x4x128xf32>
    %245 = vector.broadcast %243 : vector<1x4x1xf32> to vector<2x4x128xf32>
    %246 = arith.mulf %244, %245 : vector<2x4x128xf32>
    %247 = arith.addf %240, %246 : vector<2x4x128xf32>
    %248 = vector.extract_strided_slice %45 {offsets = [0, 29, 0], sizes = [2, 1, 128], strides = [1, 1, 1]} : vector<2x32x128xf32> to vector<2x1x128xf32>
    %249 = vector.extract_strided_slice %8 {offsets = [0, 29], sizes = [4, 1], strides = [1, 1]} : vector<4x32xf32> to vector<4x1xf32>
    %250 = vector.shape_cast %249 : vector<4x1xf32> to vector<1x4x1xf32>
    %251 = vector.broadcast %248 : vector<2x1x128xf32> to vector<2x4x128xf32>
    %252 = vector.broadcast %250 : vector<1x4x1xf32> to vector<2x4x128xf32>
    %253 = arith.mulf %251, %252 : vector<2x4x128xf32>
    %254 = arith.addf %247, %253 : vector<2x4x128xf32>
    %255 = vector.extract_strided_slice %45 {offsets = [0, 30, 0], sizes = [2, 1, 128], strides = [1, 1, 1]} : vector<2x32x128xf32> to vector<2x1x128xf32>
    %256 = vector.extract_strided_slice %8 {offsets = [0, 30], sizes = [4, 1], strides = [1, 1]} : vector<4x32xf32> to vector<4x1xf32>
    %257 = vector.shape_cast %256 : vector<4x1xf32> to vector<1x4x1xf32>
    %258 = vector.broadcast %255 : vector<2x1x128xf32> to vector<2x4x128xf32>
    %259 = vector.broadcast %257 : vector<1x4x1xf32> to vector<2x4x128xf32>
    %260 = arith.mulf %258, %259 : vector<2x4x128xf32>
    %261 = arith.addf %254, %260 : vector<2x4x128xf32>
    %262 = vector.extract_strided_slice %45 {offsets = [0, 31, 0], sizes = [2, 1, 128], strides = [1, 1, 1]} : vector<2x32x128xf32> to vector<2x1x128xf32>
    %263 = vector.extract_strided_slice %8 {offsets = [0, 31], sizes = [4, 1], strides = [1, 1]} : vector<4x32xf32> to vector<4x1xf32>
    %264 = vector.shape_cast %263 : vector<4x1xf32> to vector<1x4x1xf32>
    %265 = vector.broadcast %262 : vector<2x1x128xf32> to vector<2x4x128xf32>
    %266 = vector.broadcast %264 : vector<1x4x1xf32> to vector<2x4x128xf32>
    %267 = arith.mulf %265, %266 : vector<2x4x128xf32>
    %268 = arith.addf %261, %267 : vector<2x4x128xf32>
    %c0_12 = arith.constant 0 : index
    %c0_13 = arith.constant 0 : index
    %269 = vector.load %arg11[%c0_12, %c0_13] : memref<4x1xf32, #tpu.memory_space<vmem>>, vector<4x1xf32>
    %270 = vector.shape_cast %269 : vector<4x1xf32> to vector<1x4x1xf32>
    %271 = vector.broadcast %270 : vector<1x4x1xf32> to vector<2x4x128xf32>
    %272 = arith.addf %268, %271 : vector<2x4x128xf32>
    %273 = arith.index_cast %0 : i32 to index
    %274 = memref.load %arg2[%273] : memref<8xf32, #tpu.memory_space<smem>>
    %275 = arith.index_cast %0 : i32 to index
    %276 = memref.load %arg3[%275] : memref<8xf32, #tpu.memory_space<smem>>
    %277 = arith.index_cast %0 : i32 to index
    %278 = memref.load %arg4[%277] : memref<8xf32, #tpu.memory_space<smem>>
    %279 = vector.broadcast %274 : f32 to vector<2x4x128xf32>
    %280 = arith.mulf %279, %4 : vector<2x4x128xf32>
    %281 = vector.broadcast %276 : f32 to vector<2x4x128xf32>
    %282 = arith.mulf %281, %272 : vector<2x4x128xf32>
    %283 = arith.subf %280, %282 : vector<2x4x128xf32>
    %c0_14 = arith.constant 0 : index
    %c0_15 = arith.constant 0 : index
    %c0_16 = arith.constant 0 : index
    %c0_17 = arith.constant 0 : index
    %284 = vector.load %arg6[%c0_14, %c0_15, %c0_16, %c0_17] : memref<1x2x4x128xf32, #tpu.memory_space<vmem>>, vector<1x2x4x128xf32>
    %285 = vector.shape_cast %284 : vector<1x2x4x128xf32> to vector<2x4x128xf32>
    %286 = vector.broadcast %278 : f32 to vector<2x4x128xf32>
    %287 = arith.mulf %286, %285 : vector<2x4x128xf32>
    %288 = arith.addf %283, %287 : vector<2x4x128xf32>
    %c0_18 = arith.constant 0 : index
    %c0_19 = arith.constant 0 : index
    %c0_20 = arith.constant 0 : index
    %289 = vector.load %arg13[%c0_18, %c0_19, %c0_20] : memref<2x4x128xf32, #tpu.memory_space<vmem>>, vector<2x4x128xf32>
    tpu.vector_store %arg13[%c0_18, %c0_19, %c0_20], %288 {strides = array<i32>} : memref<2x4x128xf32, #tpu.memory_space<vmem>>, vector<2x4x128xf32>,
    %c7_i32_21 = arith.constant 7 : i32
    %290 = arith.cmpi eq, %arg1, %c7_i32_21 : i32
    %291 = arith.extui %290 : i1 to i32
    %c0_i32_22 = arith.constant 0 : i32
    %292 = arith.cmpi ne, %291, %c0_i32_22 : i32
    scf.if %292 {
      %cst_23 = arith.constant -1.000000e+00 : f32
      %cst_24 = arith.constant 1.000000e+00 : f32
      %293 = vector.broadcast %cst_23 : f32 to vector<2x4x128xf32>
      %294 = arith.maximumf %293, %288 : vector<2x4x128xf32>
      %295 = vector.broadcast %cst_24 : f32 to vector<2x4x128xf32>
      %296 = arith.minimumf %295, %294 : vector<2x4x128xf32>
      %c0_25 = arith.constant 0 : index
      %c0_26 = arith.constant 0 : index
      %c0_27 = arith.constant 0 : index
      %297 = vector.load %arg12[%c0_25, %c0_26, %c0_27] : memref<2x4x128xf32, #tpu.memory_space<vmem>>, vector<2x4x128xf32>
      tpu.vector_store %arg12[%c0_25, %c0_26, %c0_27], %296 {strides = array<i32>} : memref<2x4x128xf32, #tpu.memory_space<vmem>>, vector<2x4x128xf32>,
    } else {
    }
    return
  }
  func.func @transform_0(%arg0: i32, %arg1: i32) -> i32 {
    %c0_i32 = arith.constant 0 : i32
    %c0_i32_0 = arith.constant 0 : i32
    return %c0_i32 : i32
  }
  func.func @transform_1(%arg0: i32, %arg1: i32) -> i32 {
    %c0_i32 = arith.constant 0 : i32
    %c0_i32_0 = arith.constant 0 : i32
    return %c0_i32 : i32
  }
  func.func @transform_2(%arg0: i32, %arg1: i32) -> i32 {
    %c0_i32 = arith.constant 0 : i32
    %c0_i32_0 = arith.constant 0 : i32
    return %c0_i32 : i32
  }
  func.func @transform_3(%arg0: i32, %arg1: i32) -> (i32, i32, i32) {
    %c0_i32 = arith.constant 0 : i32
    %c0_i32_0 = arith.constant 0 : i32
    %c0_i32_1 = arith.constant 0 : i32
    return %c0_i32, %c0_i32_0, %arg0 : i32, i32, i32
  }
  func.func @transform_4(%arg0: i32, %arg1: i32) -> (i32, i32, i32, i32) {
    %c0_i32 = arith.constant 0 : i32
    %c0_i32_0 = arith.constant 0 : i32
    %c0_i32_1 = arith.constant 0 : i32
    return %arg1, %c0_i32, %c0_i32_0, %arg0 : i32, i32, i32, i32
  }
  func.func @transform_5(%arg0: i32, %arg1: i32) -> (i32, i32) {
    %c0_i32 = arith.constant 0 : i32
    %c0_i32_0 = arith.constant 0 : i32
    %c0_i32_1 = arith.constant 0 : i32
    return %c0_i32, %c0_i32_0 : i32, i32
  }
  func.func @transform_6(%arg0: i32, %arg1: i32) -> (i32, i32) {
    %c0_i32 = arith.constant 0 : i32
    %c0_i32_0 = arith.constant 0 : i32
    %c0_i32_1 = arith.constant 0 : i32
    return %c0_i32, %c0_i32_0 : i32, i32
  }
  func.func @transform_7(%arg0: i32, %arg1: i32) -> (i32, i32) {
    %c0_i32 = arith.constant 0 : i32
    %c0_i32_0 = arith.constant 0 : i32
    %c0_i32_1 = arith.constant 0 : i32
    return %c0_i32, %c0_i32_0 : i32, i32
  }
  func.func @transform_8(%arg0: i32, %arg1: i32) -> (i32, i32) {
    %c0_i32 = arith.constant 0 : i32
    %c0_i32_0 = arith.constant 0 : i32
    %c0_i32_1 = arith.constant 0 : i32
    return %c0_i32, %c0_i32_0 : i32, i32
  }
  func.func @transform_9(%arg0: i32, %arg1: i32) -> (i32, i32) {
    %c0_i32 = arith.constant 0 : i32
    %c0_i32_0 = arith.constant 0 : i32
    %c0_i32_1 = arith.constant 0 : i32
    return %c0_i32, %c0_i32_0 : i32, i32
  }
  func.func @transform_10(%arg0: i32, %arg1: i32) -> (i32, i32, i32) {
    %c0_i32 = arith.constant 0 : i32
    %c0_i32_0 = arith.constant 0 : i32
    %c0_i32_1 = arith.constant 0 : i32
    return %c0_i32, %c0_i32_0, %arg0 : i32, i32, i32
  }
}

</mosaic_0001>

<llo_original>
// kernel: tpu_custom_call.1
$region0: #{tpu_custom_call.1}
  #allocation0 [shape = 'u32[]', space=smem, size = 0x4, offset = 0x4, fixed_abs, tag = 'smem constant byte address 0x4 - core index']
  #allocation1 [shape = 'u32[144,128]{1,0:T(1,128)}', space=vmem, size = 0x12000, scoped, tag = 'internal scratch']
  #allocation2 [shape = 'f32[2,4,128]{2,1,0:T(4,128)}', space=vmem, size = 0x1000, scoped, tag = 'scratch operand']
  %s0 = inlined_call_operand.vmem [shape: f32[8], index: 0, kind: input, shape index: {}]
  %s1 = inlined_call_operand.vmem [shape: f32[8], index: 1, kind: input, shape index: {}]
  %s2 = inlined_call_operand.vmem [shape: f32[8], index: 2, kind: input, shape index: {}]
  %s3 = inlined_call_operand.vmem [shape: f32[2,4,256], index: 3, kind: input, shape index: {}]
  %s4 = inlined_call_operand.hbm [shape: f32[8,2,4,256], index: 4, kind: input, shape index: {}]
  %s5 = inlined_call_operand.vmem [shape: f32[32,4], index: 5, kind: input, shape index: {}]
  %s6 = inlined_call_operand.vmem [shape: f32[32,1], index: 6, kind: input, shape index: {}]
  %s7 = inlined_call_operand.vmem [shape: f32[32,1], index: 7, kind: input, shape index: {}]
  %s8 = inlined_call_operand.vmem [shape: f32[4,32], index: 8, kind: input, shape index: {}]
  %s9 = inlined_call_operand.vmem [shape: f32[4,1], index: 9, kind: input, shape index: {}]
  %s10 = inlined_call_operand.hbm [shape: f32[2,4,256], index: 10, kind: output, shape index: {}]
  %s11 = sld [smem:[#allocation0]]
  $region138: #{tpu_custom_call.1} parent=0
    _
  %s13 = ssub.s32 1, %s11
  %s14 = scalar_select 0, %s13, %s11
  $region1: #{tpu_custom_call.1} parent=0
    #allocation3 [shape = 'u8[512]{0}', space=smem, size = 0x200, scoped, tag = 'input window, operand 0, single buffered']
    #allocation4 [shape = 's32[2]{0}', space=sflag, size = 0x8, scoped, tag = 'scoped memory for tpu_custom_call.1']
    #allocation5 [shape = 's32[2]{0}', space=sflag, size = 0x8, scoped, tag = 'scoped memory for tpu_custom_call.1']
    #allocation6 [shape = 's32[2]{0}', space=sflag, size = 0x8, scoped, tag = 'scoped memory for tpu_custom_call.1']
    #allocation7 [shape = 'u8[512]{0}', space=smem, size = 0x200, scoped, tag = 'input window, operand 1, single buffered']
    #allocation8 [shape = 's32[1]{0}', space=sflag, size = 0x4, scoped, tag = 'scoped memory for tpu_custom_call.1']
    #allocation9 [shape = 'u8[512]{0}', space=smem, size = 0x200, scoped, tag = 'input window, operand 2, single buffered']
    #allocation10 [shape = 'u8[8192]{0}', space=vmem, size = 0x2000, scoped, tag = 'input window, operand 3']
    #allocation11 [shape = 'u8[8192]{0}', space=vmem, size = 0x2000, scoped, tag = 'input window, operand 4']
    #allocation12 [shape = 'u8[8192]{0}', space=vmem, size = 0x2000, scoped, tag = 'output window, operand 0']
    %15 = vsyncpa [#allocation6], 0
    %16 = vsyncpa [#allocation8], 0
    %17 = vsyncpa [#allocation4], 0
    %s18 = scalar_lea.sflag [#allocation4], 1
    %19 = vsyncpa %s18, 0
    %20 = vsyncpa [#allocation5], 0
    %s21 = scalar_lea.sflag [#allocation5], 1
    %22 = vsyncpa %s21, 0
    loop: start=0, step=1, limit=18
    $region2: #{tpu_custom_call.1} parent=1 // loop_pre_header
      _
    $region3: #{tpu_custom_call.1} parent=1 // loop_header
      %s24 = sphi 0, %s28
      %p25 = scmp.ge.s32.totalorder %s24, 18
      %s31 = sphi 0, %s43
      %s32 = sphi 0, %s39
      %s33 = sphi 0, %s31
      %s34 = sphi 0, %s32
      %s35 = sphi 0, %s33
      %s36 = sphi 0, %s34
      %s44 = sphi 0, %s44
      %s46 = sphi 0, %s44
      %s47 = sphi 0, %s46
      %s61 = sphi 0, %s47
      %s65 = sphi 0, %s65
      %s67 = sphi 0, %s65
      %s68 = sphi 0, %s67
      %s82 = sphi 0, %s68
      %s86 = sphi 0, %s86
      %s88 = sphi 0, %s86
      %s89 = sphi 0, %s88
      %s103 = sphi 0, %s89
      %s109 = sphi 0, %s111
      %s112 = sphi 0, %s109
      %s113 = sphi 0, %s112
      %s129 = sphi 0, %s113
      %s137 = sphi 0, %s139
      %s140 = sphi 0, %s137
      %s141 = sphi 0, %s140
      %s157 = sphi 0, %s141
      %s161 = sphi 0, %s161
      %s163 = sphi 0, %s161
      %s164 = sphi 0, %s163
      %s178 = sphi 0, %s164
      %s182 = sphi 0, %s182
      %s184 = sphi 0, %s182
      %s185 = sphi 0, %s184
      %s199 = sphi 0, %s185
      %s203 = sphi 0, %s203
      %s205 = sphi 0, %s203
      %s206 = sphi 0, %s205
      %s220 = sphi 0, %s206
      %s224 = sphi 0, %s224
      %s226 = sphi 0, %s224
      %s227 = sphi 0, %s226
      %s241 = sphi 0, %s227
      %s245 = sphi 0, %s245
      %s247 = sphi 0, %s245
      %s248 = sphi 0, %s247
      %s262 = sphi 0, %s248
      %s268 = sphi 0, %s270
      %s271 = sphi 0, %s268
      %s272 = sphi 0, %s271
      %s288 = sphi 0, %s272
    $region4: #{tpu_custom_call.1} parent=1 // loop_header_branch
      %27 = sbr.rel (%p25) target = $region8
    $region5: #{tpu_custom_call.1} parent=1 // loop_body
      %s29 = ssub.s32 %s24, 1
      %s30 = ssub.s32 %s24, 2
      %s37 = sadd.s32 1, %s32
      %p38 = scmp.ge.s32.totalorder %s37, 8
      %s39 = scalar_select %p38, 0, %s37
      %s40 = sadd.s32 1, %s31
      %s41 = scalar_select %p38, %s40, %s31
      %p42 = scmp.ge.s32.totalorder %s41, 2
      %s43 = scalar_select %p42, 0, %s41
      %s45 = sadd.s32 %s44, 1
      %p48 = scmp.eq.s32.totalorder %s24, 15
      %p49 = scmp.ne.s32.totalorder %s44, %s46
      %p50 = scmp.eq.s32.totalorder %s24, 0
      %p51 = por %p49, %p50
      %p52 = scmp.ne.s32.totalorder %s44, %s46
      %p53 = scmp.eq.s32.totalorder %s29, 15
      %p54 = por %p52, %p53
      %p55 = scmp.ne.s32.totalorder %s46, %s47
      %p56 = scmp.eq.s32.totalorder %s29, 0
      %p57 = por %p55, %p56
      %p58 = scmp.ne.s32.totalorder %s46, %s47
      %p59 = scmp.eq.s32.totalorder %s30, 15
      %p60 = por %p58, %p59
      %p62 = scmp.ne.s32.totalorder %s47, %s61
      %p63 = scmp.eq.s32.totalorder %s30, 0
      %p64 = por %p62, %p63
      %s66 = sadd.s32 %s65, 1
      %p69 = scmp.eq.s32.totalorder %s24, 15
      %p70 = scmp.ne.s32.totalorder %s65, %s67
      %p71 = scmp.eq.s32.totalorder %s24, 0
      %p72 = por %p70, %p71
      %p73 = scmp.ne.s32.totalorder %s65, %s67
      %p74 = scmp.eq.s32.totalorder %s29, 15
      %p75 = por %p73, %p74
      %p76 = scmp.ne.s32.totalorder %s67, %s68
      %p77 = scmp.eq.s32.totalorder %s29, 0
      %p78 = por %p76, %p77
      %p79 = scmp.ne.s32.totalorder %s67, %s68
      %p80 = scmp.eq.s32.totalorder %s30, 15
      %p81 = por %p79, %p80
      %p83 = scmp.ne.s32.totalorder %s68, %s82
      %p84 = scmp.eq.s32.totalorder %s30, 0
      %p85 = por %p83, %p84
      %s87 = sadd.s32 %s86, 1
      %p90 = scmp.eq.s32.totalorder %s24, 15
      %p91 = scmp.ne.s32.totalorder %s86, %s88
      %p92 = scmp.eq.s32.totalorder %s24, 0
      %p93 = por %p91, %p92
      %p94 = scmp.ne.s32.totalorder %s86, %s88
      %p95 = scmp.eq.s32.totalorder %s29, 15
      %p96 = por %p94, %p95
      %p97 = scmp.ne.s32.totalorder %s88, %s89
      %p98 = scmp.eq.s32.totalorder %s29, 0
      %p99 = por %p97, %p98
      %p100 = scmp.ne.s32.totalorder %s88, %s89
      %p101 = scmp.eq.s32.totalorder %s30, 15
      %p102 = por %p100, %p101
      %p104 = scmp.ne.s32.totalorder %s89, %s103
      %p105 = scmp.eq.s32.totalorder %s30, 0
      %p106 = por %p104, %p105
      %s107 = ssub.s32 %s31, %s43
      %p108 = scmp.eq.s32.totalorder %s107, 0
      %s110 = sadd.s32 %s109, 1
      %s111 = scalar_select %p108, %s109, %s110
      %p114 = pneg %p108
      %p115 = scmp.eq.s32.totalorder %s24, 15
      %p116 = por %p114, %p115
      %p117 = scmp.ne.s32.totalorder %s109, %s112
      %p118 = scmp.eq.s32.totalorder %s24, 0
      %p119 = por %p117, %p118
      %p120 = scmp.ne.s32.totalorder %s109, %s112
      %p121 = scmp.eq.s32.totalorder %s29, 15
      %p122 = por %p120, %p121
      %p123 = scmp.ne.s32.totalorder %s112, %s113
      %p124 = scmp.eq.s32.totalorder %s29, 0
      %p125 = por %p123, %p124
      %p126 = scmp.ne.s32.totalorder %s112, %s113
      %p127 = scmp.eq.s32.totalorder %s30, 15
      %p128 = por %p126, %p127
      %p130 = scmp.ne.s32.totalorder %s113, %s129
      %p131 = scmp.eq.s32.totalorder %s30, 0
      %p132 = por %p130, %p131
      %s133 = ssub.s32 %s32, %s39
      %s134 = ssub.s32 %s31, %s43
      %s135 = sor.u32 %s133, %s134
      %p136 = scmp.eq.s32.totalorder %s135, 0
      %s138 = sadd.s32 %s137, 1
      %s139 = scalar_select %p136, %s137, %s138
      %p142 = pneg %p136
      %p143 = scmp.eq.s32.totalorder %s24, 15
      %p144 = por %p142, %p143
      %p145 = scmp.ne.s32.totalorder %s137, %s140
      %p146 = scmp.eq.s32.totalorder %s24, 0
      %p147 = por %p145, %p146
      %p148 = scmp.ne.s32.totalorder %s137, %s140
      %p149 = scmp.eq.s32.totalorder %s29, 15
      %p150 = por %p148, %p149
      %p151 = scmp.ne.s32.totalorder %s140, %s141
      %p152 = scmp.eq.s32.totalorder %s29, 0
      %p153 = por %p151, %p152
      %p154 = scmp.ne.s32.totalorder %s140, %s141
      %p155 = scmp.eq.s32.totalorder %s30, 15
      %p156 = por %p154, %p155
      %p158 = scmp.ne.s32.totalorder %s141, %s157
      %p159 = scmp.eq.s32.totalorder %s30, 0
      %p160 = por %p158, %p159
      %s162 = sadd.s32 %s161, 1
      %p165 = scmp.eq.s32.totalorder %s24, 15
      %p166 = scmp.ne.s32.totalorder %s161, %s163
      %p167 = scmp.eq.s32.totalorder %s24, 0
      %p168 = por %p166, %p167
      %p169 = scmp.ne.s32.totalorder %s161, %s163
      %p170 = scmp.eq.s32.totalorder %s29, 15
      %p171 = por %p169, %p170
      %p172 = scmp.ne.s32.totalorder %s163, %s164
      %p173 = scmp.eq.s32.totalorder %s29, 0
      %p174 = por %p172, %p173
      %p175 = scmp.ne.s32.totalorder %s163, %s164
      %p176 = scmp.eq.s32.totalorder %s30, 15
      %p177 = por %p175, %p176
      %p179 = scmp.ne.s32.totalorder %s164, %s178
      %p180 = scmp.eq.s32.totalorder %s30, 0
      %p181 = por %p179, %p180
      %s183 = sadd.s32 %s182, 1
      %p186 = scmp.eq.s32.totalorder %s24, 15
      %p187 = scmp.ne.s32.totalorder %s182, %s184
      %p188 = scmp.eq.s32.totalorder %s24, 0
      %p189 = por %p187, %p188
      %p190 = scmp.ne.s32.totalorder %s182, %s184
      %p191 = scmp.eq.s32.totalorder %s29, 15
      %p192 = por %p190, %p191
      %p193 = scmp.ne.s32.totalorder %s184, %s185
      %p194 = scmp.eq.s32.totalorder %s29, 0
      %p195 = por %p193, %p194
      %p196 = scmp.ne.s32.totalorder %s184, %s185
      %p197 = scmp.eq.s32.totalorder %s30, 15
      %p198 = por %p196, %p197
      %p200 = scmp.ne.s32.totalorder %s185, %s199
      %p201 = scmp.eq.s32.totalorder %s30, 0
      %p202 = por %p200, %p201
      %s204 = sadd.s32 %s203, 1
      %p207 = scmp.eq.s32.totalorder %s24, 15
      %p208 = scmp.ne.s32.totalorder %s203, %s205
      %p209 = scmp.eq.s32.totalorder %s24, 0
      %p210 = por %p208, %p209
      %p211 = scmp.ne.s32.totalorder %s203, %s205
      %p212 = scmp.eq.s32.totalorder %s29, 15
      %p213 = por %p211, %p212
      %p214 = scmp.ne.s32.totalorder %s205, %s206
      %p215 = scmp.eq.s32.totalorder %s29, 0
      %p216 = por %p214, %p215
      %p217 = scmp.ne.s32.totalorder %s205, %s206
      %p218 = scmp.eq.s32.totalorder %s30, 15
      %p219 = por %p217, %p218
      %p221 = scmp.ne.s32.totalorder %s206, %s220
      %p222 = scmp.eq.s32.totalorder %s30, 0
      %p223 = por %p221, %p222
      %s225 = sadd.s32 %s224, 1
      %p228 = scmp.eq.s32.totalorder %s24, 15
      %p229 = scmp.ne.s32.totalorder %s224, %s226
      %p230 = scmp.eq.s32.totalorder %s24, 0
      %p231 = por %p229, %p230
      %p232 = scmp.ne.s32.totalorder %s224, %s226
      %p233 = scmp.eq.s32.totalorder %s29, 15
      %p234 = por %p232, %p233
      %p235 = scmp.ne.s32.totalorder %s226, %s227
      %p236 = scmp.eq.s32.totalorder %s29, 0
      %p237 = por %p235, %p236
      %p238 = scmp.ne.s32.totalorder %s226, %s227
      %p239 = scmp.eq.s32.totalorder %s30, 15
      %p240 = por %p238, %p239
      %p242 = scmp.ne.s32.totalorder %s227, %s241
      %p243 = scmp.eq.s32.totalorder %s30, 0
      %p244 = por %p242, %p243
      %s246 = sadd.s32 %s245, 1
      %p249 = scmp.eq.s32.totalorder %s24, 15
      %p250 = scmp.ne.s32.totalorder %s245, %s247
      %p251 = scmp.eq.s32.totalorder %s24, 0
      %p252 = por %p250, %p251
      %p253 = scmp.ne.s32.totalorder %s245, %s247
      %p254 = scmp.eq.s32.totalorder %s29, 15
      %p255 = por %p253, %p254
      %p256 = scmp.ne.s32.totalorder %s247, %s248
      %p257 = scmp.eq.s32.totalorder %s29, 0
      %p258 = por %p256, %p257
      %p259 = scmp.ne.s32.totalorder %s247, %s248
      %p260 = scmp.eq.s32.totalorder %s30, 15
      %p261 = por %p259, %p260
      %p263 = scmp.ne.s32.totalorder %s248, %s262
      %p264 = scmp.eq.s32.totalorder %s30, 0
      %p265 = por %p263, %p264
      %s266 = ssub.s32 %s31, %s43
      %p267 = scmp.eq.s32.totalorder %s266, 0
      %s269 = sadd.s32 %s268, 1
      %s270 = scalar_select %p267, %s268, %s269
      %p273 = pneg %p267
      %p274 = scmp.eq.s32.totalorder %s24, 15
      %p275 = por %p273, %p274
      %p276 = scmp.ne.s32.totalorder %s268, %s271
      %p277 = scmp.eq.s32.totalorder %s24, 0
      %p278 = por %p276, %p277
      %p279 = scmp.ne.s32.totalorder %s268, %s271
      %p280 = scmp.eq.s32.totalorder %s29, 15
      %p281 = por %p279, %p280
      %p282 = scmp.ne.s32.totalorder %s271, %s272
      %p283 = scmp.eq.s32.totalorder %s29, 0
      %p284 = por %p282, %p283
      %p285 = scmp.ne.s32.totalorder %s271, %s272
      %p286 = scmp.eq.s32.totalorder %s30, 15
      %p287 = por %p285, %p286
      %p289 = scmp.ne.s32.totalorder %s272, %s288
      %p290 = scmp.eq.s32.totalorder %s30, 0
      %p291 = por %p289, %p290
      %p292 = scmp.le.s32.totalorder 1, %s24
      %p293 = scmp.lt.s32.totalorder %s24, 17
      %p294 = pnand %p292, %p293
      %p295 = pneg %p294
      // Predicated region
      $region9: #{tpu_custom_call.1} parent=5 // pred_check
        _
      $region10: #{tpu_custom_call.1} parent=5 // pred_check_branch
        %297 = sbr.rel (%p294) target = $region12
      $region11: #{tpu_custom_call.1} parent=5 // pred_region
        %s298 = ssub.s32 %s24, 1
        // Predicated region
        $region13: #{tpu_custom_call.1} parent=11 // pred_check
          %p299 = pneg %p57
        $region14: #{tpu_custom_call.1} parent=11 // pred_check_branch
          %301 = sbr.rel (%p299) target = $region16
        $region15: #{tpu_custom_call.1} parent=11 // pred_region
          %s303 = ssub.s32 16, 16
          %304 = vsyncadd [#allocation6], %s303
          %s306 = sshll.u32 %s0, 4
          %s307 = int_to_ptr.vmem [resolvable:$true] %s306
          %309 = dma.vmem_to_smem %s307, 16, [#allocation3], [#allocation6]
        $region16: #{tpu_custom_call.1} parent=11 // pred_fallthru
          _
        // Predicated region
        $region17: #{tpu_custom_call.1} parent=11 // pred_check
          %p310 = pneg %p78
        $region18: #{tpu_custom_call.1} parent=11 // pred_check_branch
          %312 = sbr.rel (%p310) target = $region20
        $region19: #{tpu_custom_call.1} parent=11 // pred_region
          %s314 = ssub.s32 16, 16
          %315 = vsyncadd [#allocation8], %s314
          %s317 = sshll.u32 %s1, 4
          %s318 = int_to_ptr.vmem [resolvable:$true] %s317
          %320 = dma.vmem_to_smem %s318, 16, [#allocation7], [#allocation8]
        $region20: #{tpu_custom_call.1} parent=11 // pred_fallthru
          _
        // Predicated region
        $region21: #{tpu_custom_call.1} parent=11 // pred_check
          %p321 = pneg %p99
        $region22: #{tpu_custom_call.1} parent=11 // pred_check_branch
          %323 = sbr.rel (%p321) target = $region24
        $region23: #{tpu_custom_call.1} parent=11 // pred_region
          %s325 = ssub.s32 16, 16
          %326 = vsyncadd [#allocation8], %s325
          %s328 = sshll.u32 %s2, 4
          %s329 = int_to_ptr.vmem [resolvable:$true] %s328
          %331 = dma.vmem_to_smem %s329, 16, [#allocation9], [#allocation8]
        $region24: #{tpu_custom_call.1} parent=11 // pred_fallthru
          _
        // Predicated region
        $region25: #{tpu_custom_call.1} parent=11 // pred_check
          %p332 = pneg %p174
        $region26: #{tpu_custom_call.1} parent=11 // pred_check_branch
          %334 = sbr.rel (%p332) target = $region28
        $region27: #{tpu_custom_call.1} parent=11 // pred_region
          _
        $region28: #{tpu_custom_call.1} parent=11 // pred_fallthru
          _
        // Predicated region
        $region29: #{tpu_custom_call.1} parent=11 // pred_check
          %p335 = pneg %p195
        $region30: #{tpu_custom_call.1} parent=11 // pred_check_branch
          %337 = sbr.rel (%p335) target = $region32
        $region31: #{tpu_custom_call.1} parent=11 // pred_region
          _
        $region32: #{tpu_custom_call.1} parent=11 // pred_fallthru
          _
        // Predicated region
        $region33: #{tpu_custom_call.1} parent=11 // pred_check
          %p338 = pneg %p216
        $region34: #{tpu_custom_call.1} parent=11 // pred_check_branch
          %340 = sbr.rel (%p338) target = $region36
        $region35: #{tpu_custom_call.1} parent=11 // pred_region
          _
        $region36: #{tpu_custom_call.1} parent=11 // pred_fallthru
          _
        // Predicated region
        $region37: #{tpu_custom_call.1} parent=11 // pred_check
          %p341 = pneg %p237
        $region38: #{tpu_custom_call.1} parent=11 // pred_check_branch
          %343 = sbr.rel (%p341) target = $region40
        $region39: #{tpu_custom_call.1} parent=11 // pred_region
          _
        $region40: #{tpu_custom_call.1} parent=11 // pred_fallthru
          _
        // Predicated region
        $region41: #{tpu_custom_call.1} parent=11 // pred_check
          %p344 = pneg %p258
        $region42: #{tpu_custom_call.1} parent=11 // pred_check_branch
          %346 = sbr.rel (%p344) target = $region44
        $region43: #{tpu_custom_call.1} parent=11 // pred_region
          _
        $region44: #{tpu_custom_call.1} parent=11 // pred_fallthru
          _
      $region12: #{tpu_custom_call.1} parent=5 // pred_fallthru
        _
      %p347 = scmp.lt.s32.totalorder %s24, 16
      // Predicated region
      $region45: #{tpu_custom_call.1} parent=5 // pred_check
        %p348 = pneg %p347
      $region46: #{tpu_custom_call.1} parent=5 // pred_check_branch
        %350 = sbr.rel (%p348) target = $region48
      $region47: #{tpu_custom_call.1} parent=5 // pred_region
        // Predicated region
        $region49: #{tpu_custom_call.1} parent=47 // pred_check
          %p351 = pneg %p119
        $region50: #{tpu_custom_call.1} parent=47 // pred_check_branch
          %353 = sbr.rel (%p351) target = $region52
        $region51: #{tpu_custom_call.1} parent=47 // pred_region
          %s354 = sand.u32 %s109, 1
          %s355 = sand.u32 %s109, 1
          %s356 = smul.addr %s355, 8
          %s357 = scalar_lea.vmem [#allocation10], %s356
          %s358 = smul.addr %s31, 4
          %s359 = scalar_lea.vmem %s3, %s358
          // Predicated region
          $region53: #{tpu_custom_call.1} parent=51 // pred_check
            _
          $region54: #{tpu_custom_call.1} parent=51 // pred_check_branch
            %361 = sbr.rel (0) target = $region56
          $region55: #{tpu_custom_call.1} parent=51 // pred_region
            // Predicated region
            $region57: #{tpu_custom_call.1} parent=55 // pred_check
              _
            $region58: #{tpu_custom_call.1} parent=55 // pred_check_branch
              %363 = sbr.rel target = $region60
            $region59: #{tpu_custom_call.1} parent=55 // pred_region
              // Predicated region
              $region72: #{tpu_custom_call.1} parent=59 // pred_check
                _
              $region73: #{tpu_custom_call.1} parent=59 // pred_check_branch
                %380 = sbr.rel (0) target = $region75
              $region74: #{tpu_custom_call.1} parent=59 // pred_region
                loop: start=0, step=1, limit=1
                $region76: #{tpu_custom_call.1} parent=74 // loop_pre_header
                  _
                $region77: #{tpu_custom_call.1} parent=74 // loop_header
                  %s382 = sphi 0, %s386
                  %p383 = scmp.ge.s32.totalorder %s382, 1
                  %s387 = sphi %s359, %s359
                  %s388 = sphi %s357, %s357
                $region78: #{tpu_custom_call.1} parent=74 // loop_header_branch
                  %385 = sbr.rel (%p383) target = $region82
                $region79: #{tpu_custom_call.1} parent=74 // loop_body
                  _
                $region80: #{tpu_custom_call.1} parent=74 // loop_footer
                  %s386 = sadd.s32 1, %s382
                $region81: #{tpu_custom_call.1} parent=74 // loop_footer_branch
                  %381 = sbr.rel target = $region77
                $region82: #{tpu_custom_call.1} parent=74 // loop_exit
                  _
                loop: start=0, step=1, limit=1
                $region83: #{tpu_custom_call.1} parent=74 // loop_pre_header
                  _
                $region84: #{tpu_custom_call.1} parent=74 // loop_header
                  %s391 = sphi 0, %s395
                  %p392 = scmp.ge.s32.totalorder %s391, 1
                  %s396 = sphi %s359, %s359
                  %s397 = sphi %s357, %s357
                $region85: #{tpu_custom_call.1} parent=74 // loop_header_branch
                  %394 = sbr.rel (%p392) target = $region89
                $region86: #{tpu_custom_call.1} parent=74 // loop_body
                  %v398 = vld [vmem:[%s396] sm:$0xf]
                  %399 = vst [vmem:[%s397] sm:$0xf] %v398
                  %v400 = vld [vmem:[%s396 + $0x8] sm:$0xf]
                  %401 = vst [vmem:[%s397 + $0x4] sm:$0xf] %v400
                $region87: #{tpu_custom_call.1} parent=74 // loop_footer
                  %s395 = sadd.s32 1, %s391
                $region88: #{tpu_custom_call.1} parent=74 // loop_footer_branch
                  %390 = sbr.rel target = $region84
                $region89: #{tpu_custom_call.1} parent=74 // loop_exit
                  _
              $region75: #{tpu_custom_call.1} parent=59 // pred_fallthru
                _
            $region60: #{tpu_custom_call.1} parent=55 // pred_fallthru
              _
            // Predicated region
            $region61: #{tpu_custom_call.1} parent=55 // pred_check
              _
            $region62: #{tpu_custom_call.1} parent=55 // pred_check_branch
              %365 = sbr.rel (0) target = $region64
            $region63: #{tpu_custom_call.1} parent=55 // pred_region
              loop: start=0, step=1, limit=1
              $region65: #{tpu_custom_call.1} parent=63 // loop_pre_header
                _
              $region66: #{tpu_custom_call.1} parent=63 // loop_header
                %s368 = sphi 0, %s372
                %p369 = scmp.ge.s32.totalorder %s368, 1
                %s373 = sphi %s359, %s359
                %s374 = sphi %s357, %s357
              $region67: #{tpu_custom_call.1} parent=63 // loop_header_branch
                %371 = sbr.rel (%p369) target = $region71
              $region68: #{tpu_custom_call.1} parent=63 // loop_body
                %v375 = vld [vmem:[%s373] sm:$0xf]
                %376 = vst [vmem:[%s374] sm:$0xf] %v375
                %v377 = vld [vmem:[%s373 + $0x8] sm:$0xf]
                %378 = vst [vmem:[%s374 + $0x4] sm:$0xf] %v377
              $region69: #{tpu_custom_call.1} parent=63 // loop_footer
                %s372 = sadd.s32 1, %s368
              $region70: #{tpu_custom_call.1} parent=63 // loop_footer_branch
                %367 = sbr.rel target = $region66
              $region71: #{tpu_custom_call.1} parent=63 // loop_exit
                _
            $region64: #{tpu_custom_call.1} parent=55 // pred_fallthru
              _
          $region56: #{tpu_custom_call.1} parent=51 // pred_fallthru
            _
          %402 = vnop
        $region52: #{tpu_custom_call.1} parent=47 // pred_fallthru
          _
        // Predicated region
        $region90: #{tpu_custom_call.1} parent=47 // pred_check
          %p403 = pneg %p147
        $region91: #{tpu_custom_call.1} parent=47 // pred_check_branch
          %405 = sbr.rel (%p403) target = $region93
        $region92: #{tpu_custom_call.1} parent=47 // pred_region
          %s406 = sand.u32 %s137, 1
          %s407 = scalar_lea.sflag [#allocation4], %s406
          %s408 = sand.u32 %s137, 1
          %s409 = smul.addr %s408, 8
          %s410 = scalar_lea.vmem [#allocation11], %s409
          %s412 = ssub.s32 128, 128
          %413 = vsyncadd %s407, %s412
          %s414 = smul.addr %s32, 4
          %s415 = sadd.s32 %s31, %s414
          %s416 = smul.addr %s415, 64
          %s417 = scalar_lea.hbm %s4, %s416
          %s418 = sshll.u32 %s410, 4
          %s419 = int_to_ptr.vmem [resolvable:$true] %s418
          %424 = dma.hbm_to_vmem [thread:$0]  %s417, 128, %s419, %s407, 128, 64, 4
        $region93: #{tpu_custom_call.1} parent=47 // pred_fallthru
          _
      $region48: #{tpu_custom_call.1} parent=5 // pred_fallthru
        _
      %p425 = scmp.le.s32.totalorder 1, %s24
      %p426 = scmp.lt.s32.totalorder %s24, 17
      %p427 = pnand %p425, %p426
      %p428 = pneg %p427
      // Predicated region
      $region94: #{tpu_custom_call.1} parent=5 // pred_check
        _
      $region95: #{tpu_custom_call.1} parent=5 // pred_check_branch
        %430 = sbr.rel (%p427) target = $region97
      $region96: #{tpu_custom_call.1} parent=5 // pred_region
        %s431 = ssub.s32 %s24, 1
        // Predicated region
        $region98: #{tpu_custom_call.1} parent=96 // pred_check
          %p432 = pneg %p57
        $region99: #{tpu_custom_call.1} parent=96 // pred_check_branch
          %434 = sbr.rel (%p432) target = $region101
        $region100: #{tpu_custom_call.1} parent=96 // pred_region
          %435 = dma.done [#allocation6], 16
        $region101: #{tpu_custom_call.1} parent=96 // pred_fallthru
          _
        // Predicated region
        $region102: #{tpu_custom_call.1} parent=96 // pred_check
          %p436 = pneg %p78
        $region103: #{tpu_custom_call.1} parent=96 // pred_check_branch
          %438 = sbr.rel (%p436) target = $region105
        $region104: #{tpu_custom_call.1} parent=96 // pred_region
          %439 = dma.done [#allocation8], 16
        $region105: #{tpu_custom_call.1} parent=96 // pred_fallthru
          _
        // Predicated region
        $region106: #{tpu_custom_call.1} parent=96 // pred_check
          %p440 = pneg %p99
        $region107: #{tpu_custom_call.1} parent=96 // pred_check_branch
          %442 = sbr.rel (%p440) target = $region109
        $region108: #{tpu_custom_call.1} parent=96 // pred_region
          %443 = dma.done [#allocation8], 16
        $region109: #{tpu_custom_call.1} parent=96 // pred_fallthru
          _
        %s444 = sand.u32 %s112, 1
        %s445 = sand.u32 %s112, 1
        %s446 = smul.addr %s445, 8
        %s447 = scalar_lea.vmem [#allocation10], %s446
        // Predicated region
        $region110: #{tpu_custom_call.1} parent=96 // pred_check
          %p448 = pneg %p125
        $region111: #{tpu_custom_call.1} parent=96 // pred_check_branch
          %450 = sbr.rel (%p448) target = $region113
        $region112: #{tpu_custom_call.1} parent=96 // pred_region
          _
        $region113: #{tpu_custom_call.1} parent=96 // pred_fallthru
          _
        %s451 = sand.u32 %s140, 1
        %s452 = scalar_lea.sflag [#allocation4], %s451
        %s453 = sand.u32 %s140, 1
        %s454 = smul.addr %s453, 8
        %s455 = scalar_lea.vmem [#allocation11], %s454
        // Predicated region
        $region114: #{tpu_custom_call.1} parent=96 // pred_check
          %p456 = pneg %p153
        $region115: #{tpu_custom_call.1} parent=96 // pred_check_branch
          %458 = sbr.rel (%p456) target = $region117
        $region116: #{tpu_custom_call.1} parent=96 // pred_region
          %459 = dma.done %s452, 128
        $region117: #{tpu_custom_call.1} parent=96 // pred_fallthru
          _
        %460 = sfence
        %p461 = pneg %p57
        %p462 = pneg %p54
        %p463 = pneg %p78
        %p464 = pneg %p75
        %p465 = pneg %p99
        %p466 = pneg %p96
        %s467 = sand.u32 %s112, 1
        %s468 = sand.u32 %s112, 1
        %s469 = smul.addr %s468, 8
        %s470 = scalar_lea.vmem [#allocation10], %s469
        %p471 = pneg %p125
        %p472 = pneg %p122
        %s473 = sand.u32 %s140, 1
        %s474 = scalar_lea.sflag [#allocation4], %s473
        %s475 = sand.u32 %s140, 1
        %s476 = smul.addr %s475, 8
        %s477 = scalar_lea.vmem [#allocation11], %s476
        %p478 = pneg %p153
        %p479 = pneg %p150
        %p480 = pneg %p174
        %p481 = pneg %p171
        %p482 = pneg %p195
        %p483 = pneg %p192
        %p484 = pneg %p216
        %p485 = pneg %p213
        %p486 = pneg %p237
        %p487 = pneg %p234
        %p488 = pneg %p258
        %p489 = pneg %p255
        %p490 = pneg %p284
        %p491 = pneg %p281
        %s492 = sand.u32 %s271, 1
        %s493 = scalar_lea.sflag [#allocation5], %s492
        %s494 = sand.u32 %s271, 1
        %s495 = smul.addr %s494, 8
        %s496 = scalar_lea.vmem [#allocation12], %s495
        %s497 = ssub.s32 7, %s34
        %p498 = scmp.eq.s32.totalorder %s34, 0
        // Predicated region
        $region118: #{tpu_custom_call.1} parent=96 // pred_check
          %p499 = pneg %p498
        $region119: #{tpu_custom_call.1} parent=96 // pred_check_branch
          %501 = sbr.rel (%p499) target = $region121
        $region120: #{tpu_custom_call.1} parent=96 // pred_region
          %v502 = vld [vmem:[%s447] sm:$0xf]
          %v503 = vld [vmem:[%s447 + $0x4] sm:$0xf]
          %504 = vst [vmem:[#allocation2] sm:$0xf] %v502
          %505 = vst [vmem:[#allocation2 + $0x4] sm:$0xf] %v503
        $region121: #{tpu_custom_call.1} parent=96 // pred_fallthru
          _
        %v506 = vld [vmem:[#allocation2] sm:$0xf]
        %v507 = vld [vmem:[#allocation2 + $0x4] sm:$0xf]
        %s508 = scvt.s32.f32 %s497
        %s509 = smul.f32 %s508, 0.125
        %v510 = vld [vmem:[%s5] sm:$0xff]
        %v511 = vld [vmem:[%s5 + $0x8] sm:$0xff]
        %v512 = vld [vmem:[%s5 + $0x10] sm:$0xff]
        %v513 = vld [vmem:[%s5 + $0x18] sm:$0xff]
        %v514 = vld [vmem:[%s8] sm:$0xf]
        %v515 = vld [vmem:[%s6] sm:$0xff]
        %v516 = vld [vmem:[%s6 + $0x8] sm:$0xff]
        %v517 = vld [vmem:[%s6 + $0x10] sm:$0xff]
        %v518 = vld [vmem:[%s6 + $0x18] sm:$0xff]
        %v519 = vld [vmem:[%s7] sm:$0xff]
        %v520 = vld [vmem:[%s7 + $0x8] sm:$0xff]
        %v521 = vld [vmem:[%s7 + $0x10] sm:$0xff]
        %v522 = vld [vmem:[%s7 + $0x18] sm:$0xff]
        %v523 = vstv %s509
        %v524 = vmul.f32 %v519, %v523
        %v525 = vmul.f32 %v520, %v523
        %v526 = vmul.f32 %v521, %v523
        %v527 = vmul.f32 %v522, %v523
        %v528 = vadd.f32 %v515, %v524
        %v529 = vadd.f32 %v516, %v525
        %v530 = vadd.f32 %v517, %v526
        %v531 = vadd.f32 %v518, %v527
        %v532 = vlaneseq
        %v533 = vshrl.u32 %v532, 7
        %v534 = vsub.s32 0, %v533
        %v535 = vrot.slane %v506, %v534
        %v536 = vlaneseq
        %v537 = vshrl.u32 %v536, 7
        %v538 = vsub.s32 0, %v537
        %v539 = vrot.slane %v507, %v538
        %541 = vset.pattern.permute.xlu0 0
        %542 = vperm.xlu0 %541, %v510
        %v543 = vpop.permute.xlu0 %542
        %546 = vset.pattern.permute.xlu0 0
        %547 = vperm.xlu0 %546, %v511
        %v548 = vpop.permute.xlu0 %547
        %551 = vset.pattern.permute.xlu0 0
        %552 = vperm.xlu0 %551, %v512
        %v553 = vpop.permute.xlu0 %552
        %556 = vset.pattern.permute.xlu0 0
        %557 = vperm.xlu0 %556, %v513
        %v558 = vpop.permute.xlu0 %557
        %v560 = vmul.f32 %v535, %v543
        %v561 = vmul.f32 %v535, %v548
        %v562 = vmul.f32 %v535, %v553
        %v563 = vmul.f32 %v535, %v558
        %v564 = vmul.f32 %v539, %v543
        %v565 = vmul.f32 %v539, %v548
        %v566 = vmul.f32 %v539, %v553
        %v567 = vmul.f32 %v539, %v558
        %v568 = vlaneseq
        %v569 = vshrl.u32 %v568, 7
        %v570 = vsub.s32 1, %v569
        %v571 = vrot.slane %v506, %v570
        %v572 = vlaneseq
        %v573 = vshrl.u32 %v572, 7
        %v574 = vsub.s32 1, %v573
        %v575 = vrot.slane %v507, %v574
        %576 = vset.pattern.permute.xlu0 1
        %577 = vperm.xlu0 %576, %v510
        %v578 = vpop.permute.xlu0 %577
        %580 = vset.pattern.permute.xlu0 1
        %581 = vperm.xlu0 %580, %v511
        %v582 = vpop.permute.xlu0 %581
        %584 = vset.pattern.permute.xlu0 1
        %585 = vperm.xlu0 %584, %v512
        %v586 = vpop.permute.xlu0 %585
        %588 = vset.pattern.permute.xlu0 1
        %589 = vperm.xlu0 %588, %v513
        %v590 = vpop.permute.xlu0 %589
        %v592 = vmul.f32 %v571, %v578
        %v593 = vmul.f32 %v571, %v582
        %v594 = vmul.f32 %v571, %v586
        %v595 = vmul.f32 %v571, %v590
        %v596 = vmul.f32 %v575, %v578
        %v597 = vmul.f32 %v575, %v582
        %v598 = vmul.f32 %v575, %v586
        %v599 = vmul.f32 %v575, %v590
        %v600 = vadd.f32 %v560, %v592
        %v601 = vadd.f32 %v561, %v593
        %v602 = vadd.f32 %v562, %v594
        %v603 = vadd.f32 %v563, %v595
        %v604 = vadd.f32 %v564, %v596
        %v605 = vadd.f32 %v565, %v597
        %v606 = vadd.f32 %v566, %v598
        %v607 = vadd.f32 %v567, %v599
        %v608 = vlaneseq
        %v609 = vshrl.u32 %v608, 7
        %v610 = vsub.s32 2, %v609
        %v611 = vrot.slane %v506, %v610
        %v612 = vlaneseq
        %v613 = vshrl.u32 %v612, 7
        %v614 = vsub.s32 2, %v613
        %v615 = vrot.slane %v507, %v614
        %616 = vset.pattern.permute.xlu0 2
        %617 = vperm.xlu0 %616, %v510
        %v618 = vpop.permute.xlu0 %617
        %620 = vset.pattern.permute.xlu0 2
        %621 = vperm.xlu0 %620, %v511
        %v622 = vpop.permute.xlu0 %621
        %624 = vset.pattern.permute.xlu0 2
        %625 = vperm.xlu0 %624, %v512
        %v626 = vpop.permute.xlu0 %625
        %628 = vset.pattern.permute.xlu0 2
        %629 = vperm.xlu0 %628, %v513
        %v630 = vpop.permute.xlu0 %629
        %v632 = vmul.f32 %v611, %v618
        %v633 = vmul.f32 %v611, %v622
        %v634 = vmul.f32 %v611, %v626
        %v635 = vmul.f32 %v611, %v630
        %v636 = vmul.f32 %v615, %v618
        %v637 = vmul.f32 %v615, %v622
        %v638 = vmul.f32 %v615, %v626
        %v639 = vmul.f32 %v615, %v630
        %v640 = vadd.f32 %v600, %v632
        %v641 = vadd.f32 %v601, %v633
        %v642 = vadd.f32 %v602, %v634
        %v643 = vadd.f32 %v603, %v635
        %v644 = vadd.f32 %v604, %v636
        %v645 = vadd.f32 %v605, %v637
        %v646 = vadd.f32 %v606, %v638
        %v647 = vadd.f32 %v607, %v639
        %v648 = vlaneseq
        %v649 = vshrl.u32 %v648, 7
        %v650 = vsub.s32 3, %v649
        %v651 = vrot.slane %v506, %v650
        %v652 = vlaneseq
        %v653 = vshrl.u32 %v652, 7
        %v654 = vsub.s32 3, %v653
        %v655 = vrot.slane %v507, %v654
        %656 = vset.pattern.permute.xlu0 3
        %657 = vperm.xlu0 %656, %v510
        %v658 = vpop.permute.xlu0 %657
        %660 = vset.pattern.permute.xlu0 3
        %661 = vperm.xlu0 %660, %v511
        %v662 = vpop.permute.xlu0 %661
        %664 = vset.pattern.permute.xlu0 3
        %665 = vperm.xlu0 %664, %v512
        %v666 = vpop.permute.xlu0 %665
        %668 = vset.pattern.permute.xlu0 3
        %669 = vperm.xlu0 %668, %v513
        %v670 = vpop.permute.xlu0 %669
        %v672 = vmul.f32 %v651, %v658
        %v673 = vmul.f32 %v651, %v662
        %v674 = vmul.f32 %v651, %v666
        %v675 = vmul.f32 %v651, %v670
        %v676 = vmul.f32 %v655, %v658
        %v677 = vmul.f32 %v655, %v662
        %v678 = vmul.f32 %v655, %v666
        %v679 = vmul.f32 %v655, %v670
        %v680 = vadd.f32 %v640, %v672
        %v681 = vadd.f32 %v641, %v673
        %v682 = vadd.f32 %v642, %v674
        %v683 = vadd.f32 %v643, %v675
        %v684 = vadd.f32 %v644, %v676
        %v685 = vadd.f32 %v645, %v677
        %v686 = vadd.f32 %v646, %v678
        %v687 = vadd.f32 %v647, %v679
        %689 = vset.pattern.permute.xlu0 0
        %690 = vperm.xlu0 %689, %v528
        %v691 = vpop.permute.xlu0 %690
        %694 = vset.pattern.permute.xlu0 0
        %695 = vperm.xlu0 %694, %v529
        %v696 = vpop.permute.xlu0 %695
        %699 = vset.pattern.permute.xlu0 0
        %700 = vperm.xlu0 %699, %v530
        %v701 = vpop.permute.xlu0 %700
        %704 = vset.pattern.permute.xlu0 0
        %705 = vperm.xlu0 %704, %v531
        %v706 = vpop.permute.xlu0 %705
        %v708 = vadd.f32 %v680, %v691
        %v709 = vadd.f32 %v681, %v696
        %v710 = vadd.f32 %v682, %v701
        %v711 = vadd.f32 %v683, %v706
        %v712 = vadd.f32 %v684, %v691
        %v713 = vadd.f32 %v685, %v696
        %v714 = vadd.f32 %v686, %v701
        %v715 = vadd.f32 %v687, %v706
        %v716 = vmax.f32 %v708, 0.0
        %v717 = vmax.f32 %v709, 0.0
        %v718 = vmax.f32 %v710, 0.0
        %v719 = vmax.f32 %v711, 0.0
        %v720 = vmax.f32 %v712, 0.0
        %v721 = vmax.f32 %v713, 0.0
        %v722 = vmax.f32 %v714, 0.0
        %v723 = vmax.f32 %v715, 0.0
        %v724 = vlaneseq
        %v725 = vshrl.u32 %v724, 7
        %v726 = vsub.s32 0, %v725
        %v727 = vrot.slane %v716, %v726
        %v728 = vlaneseq
        %v729 = vshrl.u32 %v728, 7
        %v730 = vsub.s32 0, %v729
        %v731 = vrot.slane %v720, %v730
        %733 = vset.pattern.permute.xlu0 0
        %734 = vperm.xlu0 %733, %v514
        %v735 = vpop.permute.xlu0 %734
        %v737 = vmul.f32 %v727, %v735
        %v738 = vmul.f32 %v731, %v735
        %v739 = vlaneseq
        %v740 = vshrl.u32 %v739, 7
        %v741 = vsub.s32 1, %v740
        %v742 = vrot.slane %v716, %v741
        %v743 = vlaneseq
        %v744 = vshrl.u32 %v743, 7
        %v745 = vsub.s32 1, %v744
        %v746 = vrot.slane %v720, %v745
        %747 = vset.pattern.permute.xlu0 1
        %748 = vperm.xlu0 %747, %v514
        %v749 = vpop.permute.xlu0 %748
        %v751 = vmul.f32 %v742, %v749
        %v752 = vmul.f32 %v746, %v749
        %v753 = vadd.f32 %v737, %v751
        %v754 = vadd.f32 %v738, %v752
        %v755 = vlaneseq
        %v756 = vshrl.u32 %v755, 7
        %v757 = vsub.s32 2, %v756
        %v758 = vrot.slane %v716, %v757
        %v759 = vlaneseq
        %v760 = vshrl.u32 %v759, 7
        %v761 = vsub.s32 2, %v760
        %v762 = vrot.slane %v720, %v761
        %763 = vset.pattern.permute.xlu0 2
        %764 = vperm.xlu0 %763, %v514
        %v765 = vpop.permute.xlu0 %764
        %v767 = vmul.f32 %v758, %v765
        %v768 = vmul.f32 %v762, %v765
        %v769 = vadd.f32 %v753, %v767
        %v770 = vadd.f32 %v754, %v768
        %v771 = vlaneseq
        %v772 = vshrl.u32 %v771, 7
        %v773 = vsub.s32 3, %v772
        %v774 = vrot.slane %v716, %v773
        %v775 = vlaneseq
        %v776 = vshrl.u32 %v775, 7
        %v777 = vsub.s32 3, %v776
        %v778 = vrot.slane %v720, %v777
        %779 = vset.pattern.permute.xlu0 3
        %780 = vperm.xlu0 %779, %v514
        %v781 = vpop.permute.xlu0 %780
        %v783 = vmul.f32 %v774, %v781
        %v784 = vmul.f32 %v778, %v781
        %v785 = vadd.f32 %v769, %v783
        %v786 = vadd.f32 %v770, %v784
        %v787 = vlaneseq
        %v788 = vshrl.u32 %v787, 7
        %v789 = vsub.s32 4, %v788
        %v790 = vrot.slane %v716, %v789
        %v791 = vlaneseq
        %v792 = vshrl.u32 %v791, 7
        %v793 = vsub.s32 4, %v792
        %v794 = vrot.slane %v720, %v793
        %795 = vset.pattern.permute.xlu0 4
        %796 = vperm.xlu0 %795, %v514
        %v797 = vpop.permute.xlu0 %796
        %v799 = vmul.f32 %v790, %v797
        %v800 = vmul.f32 %v794, %v797
        %v801 = vadd.f32 %v785, %v799
        %v802 = vadd.f32 %v786, %v800
        %v803 = vlaneseq
        %v804 = vshrl.u32 %v803, 7
        %v805 = vsub.s32 5, %v804
        %v806 = vrot.slane %v716, %v805
        %v807 = vlaneseq
        %v808 = vshrl.u32 %v807, 7
        %v809 = vsub.s32 5, %v808
        %v810 = vrot.slane %v720, %v809
        %811 = vset.pattern.permute.xlu0 5
        %812 = vperm.xlu0 %811, %v514
        %v813 = vpop.permute.xlu0 %812
        %v815 = vmul.f32 %v806, %v813
        %v816 = vmul.f32 %v810, %v813
        %v817 = vadd.f32 %v801, %v815
        %v818 = vadd.f32 %v802, %v816
        %v819 = vlaneseq
        %v820 = vshrl.u32 %v819, 7
        %v821 = vsub.s32 6, %v820
        %v822 = vrot.slane %v716, %v821
        %v823 = vlaneseq
        %v824 = vshrl.u32 %v823, 7
        %v825 = vsub.s32 6, %v824
        %v826 = vrot.slane %v720, %v825
        %827 = vset.pattern.permute.xlu0 6
        %828 = vperm.xlu0 %827, %v514
        %v829 = vpop.permute.xlu0 %828
        %v831 = vmul.f32 %v822, %v829
        %v832 = vmul.f32 %v826, %v829
        %v833 = vadd.f32 %v817, %v831
        %v834 = vadd.f32 %v818, %v832
        %v835 = vlaneseq
        %v836 = vshrl.u32 %v835, 7
        %v837 = vsub.s32 7, %v836
        %v838 = vrot.slane %v716, %v837
        %v839 = vlaneseq
        %v840 = vshrl.u32 %v839, 7
        %v841 = vsub.s32 7, %v840
        %v842 = vrot.slane %v720, %v841
        %843 = vset.pattern.permute.xlu0 7
        %844 = vperm.xlu0 %843, %v514
        %v845 = vpop.permute.xlu0 %844
        %v847 = vmul.f32 %v838, %v845
        %v848 = vmul.f32 %v842, %v845
        %v849 = vadd.f32 %v833, %v847
        %v850 = vadd.f32 %v834, %v848
        %v851 = vlaneseq
        %v852 = vshrl.u32 %v851, 7
        %v853 = vsub.s32 0, %v852
        %v854 = vrot.slane %v717, %v853
        %v855 = vlaneseq
        %v856 = vshrl.u32 %v855, 7
        %v857 = vsub.s32 0, %v856
        %v858 = vrot.slane %v721, %v857
        %859 = vset.pattern.permute.xlu0 8
        %860 = vperm.xlu0 %859, %v514
        %v861 = vpop.permute.xlu0 %860
        %v863 = vmul.f32 %v854, %v861
        %v864 = vmul.f32 %v858, %v861
        %v865 = vadd.f32 %v849, %v863
        %v866 = vadd.f32 %v850, %v864
        %v867 = vlaneseq
        %v868 = vshrl.u32 %v867, 7
        %v869 = vsub.s32 1, %v868
        %v870 = vrot.slane %v717, %v869
        %v871 = vlaneseq
        %v872 = vshrl.u32 %v871, 7
        %v873 = vsub.s32 1, %v872
        %v874 = vrot.slane %v721, %v873
        %875 = vset.pattern.permute.xlu0 9
        %876 = vperm.xlu0 %875, %v514
        %v877 = vpop.permute.xlu0 %876
        %v879 = vmul.f32 %v870, %v877
        %v880 = vmul.f32 %v874, %v877
        %v881 = vadd.f32 %v865, %v879
        %v882 = vadd.f32 %v866, %v880
        %v883 = vlaneseq
        %v884 = vshrl.u32 %v883, 7
        %v885 = vsub.s32 2, %v884
        %v886 = vrot.slane %v717, %v885
        %v887 = vlaneseq
        %v888 = vshrl.u32 %v887, 7
        %v889 = vsub.s32 2, %v888
        %v890 = vrot.slane %v721, %v889
        %891 = vset.pattern.permute.xlu0 10
        %892 = vperm.xlu0 %891, %v514
        %v893 = vpop.permute.xlu0 %892
        %v895 = vmul.f32 %v886, %v893
        %v896 = vmul.f32 %v890, %v893
        %v897 = vadd.f32 %v881, %v895
        %v898 = vadd.f32 %v882, %v896
        %v899 = vlaneseq
        %v900 = vshrl.u32 %v899, 7
        %v901 = vsub.s32 3, %v900
        %v902 = vrot.slane %v717, %v901
        %v903 = vlaneseq
        %v904 = vshrl.u32 %v903, 7
        %v905 = vsub.s32 3, %v904
        %v906 = vrot.slane %v721, %v905
        %907 = vset.pattern.permute.xlu0 11
        %908 = vperm.xlu0 %907, %v514
        %v909 = vpop.permute.xlu0 %908
        %v911 = vmul.f32 %v902, %v909
        %v912 = vmul.f32 %v906, %v909
        %v913 = vadd.f32 %v897, %v911
        %v914 = vadd.f32 %v898, %v912
        %v915 = vlaneseq
        %v916 = vshrl.u32 %v915, 7
        %v917 = vsub.s32 4, %v916
        %v918 = vrot.slane %v717, %v917
        %v919 = vlaneseq
        %v920 = vshrl.u32 %v919, 7
        %v921 = vsub.s32 4, %v920
        %v922 = vrot.slane %v721, %v921
        %923 = vset.pattern.permute.xlu0 12
        %924 = vperm.xlu0 %923, %v514
        %v925 = vpop.permute.xlu0 %924
        %v927 = vmul.f32 %v918, %v925
        %v928 = vmul.f32 %v922, %v925
        %v929 = vadd.f32 %v913, %v927
        %v930 = vadd.f32 %v914, %v928
        %v931 = vlaneseq
        %v932 = vshrl.u32 %v931, 7
        %v933 = vsub.s32 5, %v932
        %v934 = vrot.slane %v717, %v933
        %v935 = vlaneseq
        %v936 = vshrl.u32 %v935, 7
        %v937 = vsub.s32 5, %v936
        %v938 = vrot.slane %v721, %v937
        %939 = vset.pattern.permute.xlu0 13
        %940 = vperm.xlu0 %939, %v514
        %v941 = vpop.permute.xlu0 %940
        %v943 = vmul.f32 %v934, %v941
        %v944 = vmul.f32 %v938, %v941
        %v945 = vadd.f32 %v929, %v943
        %v946 = vadd.f32 %v930, %v944
        %v947 = vlaneseq
        %v948 = vshrl.u32 %v947, 7
        %v949 = vsub.s32 6, %v948
        %v950 = vrot.slane %v717, %v949
        %v951 = vlaneseq
        %v952 = vshrl.u32 %v951, 7
        %v953 = vsub.s32 6, %v952
        %v954 = vrot.slane %v721, %v953
        %955 = vset.pattern.permute.xlu0 14
        %956 = vperm.xlu0 %955, %v514
        %v957 = vpop.permute.xlu0 %956
        %v959 = vmul.f32 %v950, %v957
        %v960 = vmul.f32 %v954, %v957
        %v961 = vadd.f32 %v945, %v959
        %v962 = vadd.f32 %v946, %v960
        %v963 = vlaneseq
        %v964 = vshrl.u32 %v963, 7
        %v965 = vsub.s32 7, %v964
        %v966 = vrot.slane %v717, %v965
        %v967 = vlaneseq
        %v968 = vshrl.u32 %v967, 7
        %v969 = vsub.s32 7, %v968
        %v970 = vrot.slane %v721, %v969
        %971 = vset.pattern.permute.xlu0 15
        %972 = vperm.xlu0 %971, %v514
        %v973 = vpop.permute.xlu0 %972
        %v975 = vmul.f32 %v966, %v973
        %v976 = vmul.f32 %v970, %v973
        %v977 = vadd.f32 %v961, %v975
        %v978 = vadd.f32 %v962, %v976
        %v979 = vlaneseq
        %v980 = vshrl.u32 %v979, 7
        %v981 = vsub.s32 0, %v980
        %v982 = vrot.slane %v718, %v981
        %v983 = vlaneseq
        %v984 = vshrl.u32 %v983, 7
        %v985 = vsub.s32 0, %v984
        %v986 = vrot.slane %v722, %v985
        %987 = vset.pattern.permute.xlu0 16
        %988 = vperm.xlu0 %987, %v514
        %v989 = vpop.permute.xlu0 %988
        %v991 = vmul.f32 %v982, %v989
        %v992 = vmul.f32 %v986, %v989
        %v993 = vadd.f32 %v977, %v991
        %v994 = vadd.f32 %v978, %v992
        %v995 = vlaneseq
        %v996 = vshrl.u32 %v995, 7
        %v997 = vsub.s32 1, %v996
        %v998 = vrot.slane %v718, %v997
        %v999 = vlaneseq
        %v1000 = vshrl.u32 %v999, 7
        %v1001 = vsub.s32 1, %v1000
        %v1002 = vrot.slane %v722, %v1001
        %1003 = vset.pattern.permute.xlu0 17
        %1004 = vperm.xlu0 %1003, %v514
        %v1005 = vpop.permute.xlu0 %1004
        %v1007 = vmul.f32 %v998, %v1005
        %v1008 = vmul.f32 %v1002, %v1005
        %v1009 = vadd.f32 %v993, %v1007
        %v1010 = vadd.f32 %v994, %v1008
        %v1011 = vlaneseq
        %v1012 = vshrl.u32 %v1011, 7
        %v1013 = vsub.s32 2, %v1012
        %v1014 = vrot.slane %v718, %v1013
        %v1015 = vlaneseq
        %v1016 = vshrl.u32 %v1015, 7
        %v1017 = vsub.s32 2, %v1016
        %v1018 = vrot.slane %v722, %v1017
        %1019 = vset.pattern.permute.xlu0 18
        %1020 = vperm.xlu0 %1019, %v514
        %v1021 = vpop.permute.xlu0 %1020
        %v1023 = vmul.f32 %v1014, %v1021
        %v1024 = vmul.f32 %v1018, %v1021
        %v1025 = vadd.f32 %v1009, %v1023
        %v1026 = vadd.f32 %v1010, %v1024
        %v1027 = vlaneseq
        %v1028 = vshrl.u32 %v1027, 7
        %v1029 = vsub.s32 3, %v1028
        %v1030 = vrot.slane %v718, %v1029
        %v1031 = vlaneseq
        %v1032 = vshrl.u32 %v1031, 7
        %v1033 = vsub.s32 3, %v1032
        %v1034 = vrot.slane %v722, %v1033
        %1035 = vset.pattern.permute.xlu0 19
        %1036 = vperm.xlu0 %1035, %v514
        %v1037 = vpop.permute.xlu0 %1036
        %v1039 = vmul.f32 %v1030, %v1037
        %v1040 = vmul.f32 %v1034, %v1037
        %v1041 = vadd.f32 %v1025, %v1039
        %v1042 = vadd.f32 %v1026, %v1040
        %v1043 = vlaneseq
        %v1044 = vshrl.u32 %v1043, 7
        %v1045 = vsub.s32 4, %v1044
        %v1046 = vrot.slane %v718, %v1045
        %v1047 = vlaneseq
        %v1048 = vshrl.u32 %v1047, 7
        %v1049 = vsub.s32 4, %v1048
        %v1050 = vrot.slane %v722, %v1049
        %1051 = vset.pattern.permute.xlu0 20
        %1052 = vperm.xlu0 %1051, %v514
        %v1053 = vpop.permute.xlu0 %1052
        %v1055 = vmul.f32 %v1046, %v1053
        %v1056 = vmul.f32 %v1050, %v1053
        %v1057 = vadd.f32 %v1041, %v1055
        %v1058 = vadd.f32 %v1042, %v1056
        %v1059 = vlaneseq
        %v1060 = vshrl.u32 %v1059, 7
        %v1061 = vsub.s32 5, %v1060
        %v1062 = vrot.slane %v718, %v1061
        %v1063 = vlaneseq
        %v1064 = vshrl.u32 %v1063, 7
        %v1065 = vsub.s32 5, %v1064
        %v1066 = vrot.slane %v722, %v1065
        %1067 = vset.pattern.permute.xlu0 21
        %1068 = vperm.xlu0 %1067, %v514
        %v1069 = vpop.permute.xlu0 %1068
        %v1071 = vmul.f32 %v1062, %v1069
        %v1072 = vmul.f32 %v1066, %v1069
        %v1073 = vadd.f32 %v1057, %v1071
        %v1074 = vadd.f32 %v1058, %v1072
        %v1075 = vlaneseq
        %v1076 = vshrl.u32 %v1075, 7
        %v1077 = vsub.s32 6, %v1076
        %v1078 = vrot.slane %v718, %v1077
        %v1079 = vlaneseq
        %v1080 = vshrl.u32 %v1079, 7
        %v1081 = vsub.s32 6, %v1080
        %v1082 = vrot.slane %v722, %v1081
        %1083 = vset.pattern.permute.xlu0 22
        %1084 = vperm.xlu0 %1083, %v514
        %v1085 = vpop.permute.xlu0 %1084
        %v1087 = vmul.f32 %v1078, %v1085
        %v1088 = vmul.f32 %v1082, %v1085
        %v1089 = vadd.f32 %v1073, %v1087
        %v1090 = vadd.f32 %v1074, %v1088
        %v1091 = vlaneseq
        %v1092 = vshrl.u32 %v1091, 7
        %v1093 = vsub.s32 7, %v1092
        %v1094 = vrot.slane %v718, %v1093
        %v1095 = vlaneseq
        %v1096 = vshrl.u32 %v1095, 7
        %v1097 = vsub.s32 7, %v1096
        %v1098 = vrot.slane %v722, %v1097
        %1099 = vset.pattern.permute.xlu0 23
        %1100 = vperm.xlu0 %1099, %v514
        %v1101 = vpop.permute.xlu0 %1100
        %v1103 = vmul.f32 %v1094, %v1101
        %v1104 = vmul.f32 %v1098, %v1101
        %v1105 = vadd.f32 %v1089, %v1103
        %v1106 = vadd.f32 %v1090, %v1104
        %v1107 = vlaneseq
        %v1108 = vshrl.u32 %v1107, 7
        %v1109 = vsub.s32 0, %v1108
        %v1110 = vrot.slane %v719, %v1109
        %v1111 = vlaneseq
        %v1112 = vshrl.u32 %v1111, 7
        %v1113 = vsub.s32 0, %v1112
        %v1114 = vrot.slane %v723, %v1113
        %1115 = vset.pattern.permute.xlu0 24
        %1116 = vperm.xlu0 %1115, %v514
        %v1117 = vpop.permute.xlu0 %1116
        %v1119 = vmul.f32 %v1110, %v1117
        %v1120 = vmul.f32 %v1114, %v1117
        %v1121 = vadd.f32 %v1105, %v1119
        %v1122 = vadd.f32 %v1106, %v1120
        %v1123 = vlaneseq
        %v1124 = vshrl.u32 %v1123, 7
        %v1125 = vsub.s32 1, %v1124
        %v1126 = vrot.slane %v719, %v1125
        %v1127 = vlaneseq
        %v1128 = vshrl.u32 %v1127, 7
        %v1129 = vsub.s32 1, %v1128
        %v1130 = vrot.slane %v723, %v1129
        %1131 = vset.pattern.permute.xlu0 25
        %1132 = vperm.xlu0 %1131, %v514
        %v1133 = vpop.permute.xlu0 %1132
        %v1135 = vmul.f32 %v1126, %v1133
        %v1136 = vmul.f32 %v1130, %v1133
        %v1137 = vadd.f32 %v1121, %v1135
        %v1138 = vadd.f32 %v1122, %v1136
        %v1139 = vlaneseq
        %v1140 = vshrl.u32 %v1139, 7
        %v1141 = vsub.s32 2, %v1140
        %v1142 = vrot.slane %v719, %v1141
        %v1143 = vlaneseq
        %v1144 = vshrl.u32 %v1143, 7
        %v1145 = vsub.s32 2, %v1144
        %v1146 = vrot.slane %v723, %v1145
        %1147 = vset.pattern.permute.xlu0 26
        %1148 = vperm.xlu0 %1147, %v514
        %v1149 = vpop.permute.xlu0 %1148
        %v1151 = vmul.f32 %v1142, %v1149
        %v1152 = vmul.f32 %v1146, %v1149
        %v1153 = vadd.f32 %v1137, %v1151
        %v1154 = vadd.f32 %v1138, %v1152
        %v1155 = vlaneseq
        %v1156 = vshrl.u32 %v1155, 7
        %v1157 = vsub.s32 3, %v1156
        %v1158 = vrot.slane %v719, %v1157
        %v1159 = vlaneseq
        %v1160 = vshrl.u32 %v1159, 7
        %v1161 = vsub.s32 3, %v1160
        %v1162 = vrot.slane %v723, %v1161
        %1163 = vset.pattern.permute.xlu0 27
        %1164 = vperm.xlu0 %1163, %v514
        %v1165 = vpop.permute.xlu0 %1164
        %v1167 = vmul.f32 %v1158, %v1165
        %v1168 = vmul.f32 %v1162, %v1165
        %v1169 = vadd.f32 %v1153, %v1167
        %v1170 = vadd.f32 %v1154, %v1168
        %v1171 = vlaneseq
        %v1172 = vshrl.u32 %v1171, 7
        %v1173 = vsub.s32 4, %v1172
        %v1174 = vrot.slane %v719, %v1173
        %v1175 = vlaneseq
        %v1176 = vshrl.u32 %v1175, 7
        %v1177 = vsub.s32 4, %v1176
        %v1178 = vrot.slane %v723, %v1177
        %1179 = vset.pattern.permute.xlu0 28
        %1180 = vperm.xlu0 %1179, %v514
        %v1181 = vpop.permute.xlu0 %1180
        %v1183 = vmul.f32 %v1174, %v1181
        %v1184 = vmul.f32 %v1178, %v1181
        %v1185 = vadd.f32 %v1169, %v1183
        %v1186 = vadd.f32 %v1170, %v1184
        %v1187 = vlaneseq
        %v1188 = vshrl.u32 %v1187, 7
        %v1189 = vsub.s32 5, %v1188
        %v1190 = vrot.slane %v719, %v1189
        %v1191 = vlaneseq
        %v1192 = vshrl.u32 %v1191, 7
        %v1193 = vsub.s32 5, %v1192
        %v1194 = vrot.slane %v723, %v1193
        %1195 = vset.pattern.permute.xlu0 29
        %1196 = vperm.xlu0 %1195, %v514
        %v1197 = vpop.permute.xlu0 %1196
        %v1199 = vmul.f32 %v1190, %v1197
        %v1200 = vmul.f32 %v1194, %v1197
        %v1201 = vadd.f32 %v1185, %v1199
        %v1202 = vadd.f32 %v1186, %v1200
        %v1203 = vlaneseq
        %v1204 = vshrl.u32 %v1203, 7
        %v1205 = vsub.s32 6, %v1204
        %v1206 = vrot.slane %v719, %v1205
        %v1207 = vlaneseq
        %v1208 = vshrl.u32 %v1207, 7
        %v1209 = vsub.s32 6, %v1208
        %v1210 = vrot.slane %v723, %v1209
        %1211 = vset.pattern.permute.xlu0 30
        %1212 = vperm.xlu0 %1211, %v514
        %v1213 = vpop.permute.xlu0 %1212
        %v1215 = vmul.f32 %v1206, %v1213
        %v1216 = vmul.f32 %v1210, %v1213
        %v1217 = vadd.f32 %v1201, %v1215
        %v1218 = vadd.f32 %v1202, %v1216
        %v1219 = vlaneseq
        %v1220 = vshrl.u32 %v1219, 7
        %v1221 = vsub.s32 7, %v1220
        %v1222 = vrot.slane %v719, %v1221
        %v1223 = vlaneseq
        %v1224 = vshrl.u32 %v1223, 7
        %v1225 = vsub.s32 7, %v1224
        %v1226 = vrot.slane %v723, %v1225
        %1227 = vset.pattern.permute.xlu0 31
        %1228 = vperm.xlu0 %1227, %v514
        %v1229 = vpop.permute.xlu0 %1228
        %v1231 = vmul.f32 %v1222, %v1229
        %v1232 = vmul.f32 %v1226, %v1229
        %v1233 = vadd.f32 %v1217, %v1231
        %v1234 = vadd.f32 %v1218, %v1232
        %v1235 = vld [vmem:[%s9] sm:$0xf]
        %1237 = vset.pattern.permute.xlu0 0
        %1238 = vperm.xlu0 %1237, %v1235
        %v1239 = vpop.permute.xlu0 %1238
        %v1241 = vadd.f32 %v1233, %v1239
        %v1242 = vadd.f32 %v1234, %v1239
        %s1243 = sld [smem:[#allocation3 + %s497]]
        %s1244 = sld [smem:[#allocation7 + %s497]]
        %s1245 = sld [smem:[#allocation9 + %s497]]
        %v1246 = vstv %s1243
        %v1247 = vmul.f32 %v1246, %v506
        %v1248 = vmul.f32 %v1246, %v507
        %v1249 = vstv %s1244
        %v1250 = vmul.f32 %v1249, %v1241
        %v1251 = vmul.f32 %v1249, %v1242
        %v1252 = vsub.f32 %v1247, %v1250
        %v1253 = vsub.f32 %v1248, %v1251
        %v1254 = vld [vmem:[%s455] sm:$0xf]
        %v1255 = vld [vmem:[%s455 + $0x4] sm:$0xf]
        %v1256 = vstv %s1245
        %v1257 = vmul.f32 %v1256, %v1254
        %v1258 = vmul.f32 %v1256, %v1255
        %v1259 = vadd.f32 %v1252, %v1257
        %v1260 = vadd.f32 %v1253, %v1258
        %1261 = vst [vmem:[#allocation2] sm:$0xf] %v1259
        %1262 = vst [vmem:[#allocation2 + $0x4] sm:$0xf] %v1260
        %p1263 = scmp.eq.s32.totalorder %s34, 7
        // Predicated region
        $region122: #{tpu_custom_call.1} parent=96 // pred_check
          %p1264 = pneg %p1263
        $region123: #{tpu_custom_call.1} parent=96 // pred_check_branch
          %1266 = sbr.rel (%p1264) target = $region125
        $region124: #{tpu_custom_call.1} parent=96 // pred_region
          %v1267 = vmax.f32 %v1259, -1.0
          %v1268 = vmax.f32 %v1260, -1.0
          %v1269 = vmin.f32 %v1267, 1.0
          %v1270 = vmin.f32 %v1268, 1.0
          %1271 = vst [vmem:[%s496] sm:$0xf] %v1269
          %1272 = vst [vmem:[%s496 + $0x4] sm:$0xf] %v1270
        $region125: #{tpu_custom_call.1} parent=96 // pred_fallthru
          _
        %s1273 = sand.u32 %s271, 1
        %s1274 = scalar_lea.sflag [#allocation5], %s1273
        %s1275 = sand.u32 %s271, 1
        %s1276 = smul.addr %s1275, 8
        %s1277 = scalar_lea.vmem [#allocation12], %s1276
        // Predicated region
        $region126: #{tpu_custom_call.1} parent=96 // pred_check
          %p1278 = pneg %p281
        $region127: #{tpu_custom_call.1} parent=96 // pred_check_branch
          %1280 = sbr.rel (%p1278) target = $region129
        $region128: #{tpu_custom_call.1} parent=96 // pred_region
          %s1282 = ssub.s32 128, 128
          %1283 = vsyncadd %s1274, %s1282
          %s1284 = smul.addr %s33, 64
          %s1285 = scalar_lea.hbm %s10, %s1284
          %s1286 = sshll.u32 %s1277, 4
          %s1287 = int_to_ptr.vmem [resolvable:$true] %s1286
          %1292 = dma.vmem_to_hbm [thread:$0]  %s1287, 128, %s1285, %s1274, 64, 128, 4
        $region129: #{tpu_custom_call.1} parent=96 // pred_fallthru
          _
      $region97: #{tpu_custom_call.1} parent=5 // pred_fallthru
        _
      %p1293 = scmp.le.s32.totalorder 2, %s24
      // Predicated region
      $region130: #{tpu_custom_call.1} parent=5 // pred_check
        %p1294 = pneg %p1293
      $region131: #{tpu_custom_call.1} parent=5 // pred_check_branch
        %1296 = sbr.rel (%p1294) target = $region133
      $region132: #{tpu_custom_call.1} parent=5 // pred_region
        %s1297 = ssub.s32 %s24, 2
        // Predicated region
        $region134: #{tpu_custom_call.1} parent=132 // pred_check
          %p1298 = pneg %p287
        $region135: #{tpu_custom_call.1} parent=132 // pred_check_branch
          %1300 = sbr.rel (%p1298) target = $region137
        $region136: #{tpu_custom_call.1} parent=132 // pred_region
          %s1301 = sand.u32 %s272, 1
          %s1302 = scalar_lea.sflag [#allocation5], %s1301
          %s1303 = sand.u32 %s272, 1
          %s1304 = smul.addr %s1303, 8
          %s1305 = scalar_lea.vmem [#allocation12], %s1304
          %1306 = dma.done %s1302, 128
        $region137: #{tpu_custom_call.1} parent=132 // pred_fallthru
          _
      $region133: #{tpu_custom_call.1} parent=5 // pred_fallthru
        _
    $region6: #{tpu_custom_call.1} parent=1 // loop_footer
      %s28 = sadd.s32 1, %s24
    $region7: #{tpu_custom_call.1} parent=1 // loop_footer_branch
      %23 = sbr.rel target = $region3
    $region8: #{tpu_custom_call.1} parent=1 // loop_exit
      _
    %1307 = vsyncpa [#allocation4], 1
    %s1308 = scalar_lea.sflag [#allocation4], 1
    %1309 = vsyncpa %s1308, 1
    %1310 = vsyncpa [#allocation5], 1
    %s1311 = scalar_lea.sflag [#allocation5], 1
    %1312 = vsyncpa %s1311, 1
    %1313 = vsyncpa [#allocation6], 1
    %s1314 = scalar_lea.sflag [#allocation6], 1
    %1315 = vsyncpa %s1314, 1
    %1316 = vsyncpa [#allocation8], 1

</llo_original>
